<compile_context>
chip_gen: v5e
topology: v5e:2x2
jax: 0.10.0
libtpu: 0.0.40
codegen_flags: <defaults>
</compile_context>

<pallas_src>
import functools

import jax
import jax.numpy as jnp
from jax import lax
from jax.experimental import pallas as pl
from jax.experimental.pallas import tpu as pltpu


PARAM_ORDER = ("wqkv", "bqkv", "wproj", "bproj", "g0", "beta0",
               "w1", "b1", "w2", "b2", "g1", "beta1")
_MATRIX_PARAMS = ("wqkv", "wproj", "w1", "w2")
_MIB = 1024 * 1024


def _layernorm(x, gamma, beta, eps=1e-5):
    mean = jnp.mean(x, axis=-1, keepdims=True)
    var = jnp.mean((x - mean) ** 2, axis=-1, keepdims=True)
    return (x - mean) * lax.rsqrt(var + eps) * gamma + beta


def transformer_block_kernel(x_ref,
                             wqkv_ref, bqkv_ref,
                             wproj_ref, bproj_ref,
                             g0_ref, beta0_ref,
                             w1_ref, b1_ref,
                             w2_ref, b2_ref,
                             g1_ref, beta1_ref,
                             o_ref,
                             *, scale, s_real, matmul_dtype, approx_recip):
    bt, s_pad, d = x_ref.shape

    x2d = x_ref[...].astype(jnp.float32).reshape(bt * s_pad, d)   # (bt*S, D)

    def mm(a_mm, w_ref, b_ref):
        # MXU matmul: operands already in matmul_dtype, accumulation in f32.
        return (jnp.dot(a_mm, w_ref[...].astype(matmul_dtype),
                        preferred_element_type=jnp.float32)
                + b_ref[...].astype(jnp.float32))

    # ---- Multi_Head: fused QKV projection (one MXU pass) --------------------
    qkv = mm(x2d.astype(matmul_dtype), wqkv_ref, bqkv_ref)        # (bt*S, 3D)
    q = qkv[:, 0 * d:1 * d].reshape(bt, s_pad, d) * scale         # fold scale into q
    k = qkv[:, 1 * d:2 * d].reshape(bt, s_pad, d)
    v = qkv[:, 2 * d:3 * d].reshape(bt, s_pad, d)

    attn = jnp.einsum('bqd,bkd->bqk',
                      q.astype(matmul_dtype), k.astype(matmul_dtype),
                      preferred_element_type=jnp.float32)         # (bt, S, S)
    if s_pad != s_real:
        # Mask padded key columns out of the softmax.
        key_idx = lax.broadcasted_iota(jnp.int32, (1, 1, s_pad), 2)
        attn = jnp.where(key_idx < s_real, attn, -1e30)

    # TODO(synk): for S >~ 512, tile keys with an online softmax (flash-style)
    # instead of materializing the full (bt, S, S) score tensor.
    attn = attn - jnp.max(attn, axis=-1, keepdims=True)
    p = jnp.exp(attn)
    denom = jnp.sum(p, axis=-1, keepdims=True)
    p = p * pl.reciprocal(denom, approx=approx_recip)

    mh = jnp.einsum('bqk,bkd->bqd',
                    p.astype(matmul_dtype), v.astype(matmul_dtype),
                    preferred_element_type=jnp.float32)           # (bt, S, D)
    mh = mm(mh.reshape(bt * s_pad, d).astype(matmul_dtype), wproj_ref, bproj_ref)
    # attn_drop / proj_drop have p=0 -> identity.

    # ---- residual 1 + LayerNorm0 --------------------------------------------
    x0 = _layernorm(mh + x2d, g0_ref[...], beta0_ref[...])

    # ---- MLP: Linear(D, 4D) -> ReLU -> Linear(4D, D) -------------------------
    # TODO(synk): with an f32 MXU path at ViT-Base D on v7x, stream w1/w2 over
    # the 4*D hidden dim (extra grid axis / emit_pipeline) instead of keeping
    # them fully resident.
    h = jnp.maximum(mm(x0.astype(matmul_dtype), w1_ref, b1_ref), 0.0)
    y = mm(h.astype(matmul_dtype), w2_ref, b2_ref) + x0

    # ---- residual 2 + LayerNorm1 --------------------------------------------
    out = _layernorm(y, g1_ref[...], beta1_ref[...])
    o_ref[...] = out.reshape(bt, s_pad, d).astype(o_ref.dtype)


def transformer_block(x, params, head, *, matmul_dtype=jnp.bfloat16,
                      batch_tile=None, target_rows=512,
                      approx_softmax_recip=False,
                      single_buffer_weights=True):
    B, S, D = x.shape
    scale = float((D // head) ** -0.5)
    # TODO(synk): real ViT use should assert D % 128 == 0 (lane alignment so
    # qkv column slices stay tile-aligned); left relaxed for the toy self-test.

    # Pad the sequence length to a multiple of 8 so the flattened (bt*S, D)
    # view and the (S, S) attention tile are sublane-aligned.
    s_pad = ((S + 7) // 8) * 8
    x_p = x if s_pad == S else jnp.pad(x, ((0, 0), (0, s_pad - S), (0, 0)))

    # Rows per grid step: enough to fill the 256-wide MXU (v6e/v7x), dividing
    # B, and preferring an even grid so megacore can split the batch axis.
    if batch_tile is None:
        want = max(1, target_rows // s_pad)
        divs = [d for d in range(1, B + 1) if B % d == 0]
        cands = [d for d in divs if d <= want] or [1]
        bt = max(cands, key=lambda d: ((B // d) % 2 == 0, d))
    else:
        bt = batch_tile
        assert B % bt == 0, "batch_tile must divide the batch size"
    grid = (B // bt,)

    # bf16 weight matrices halve DMA traffic / VMEM residency; biases and
    # LayerNorm params stay f32 (elementwise math remains f32 everywhere).
    def maybe_cast(name, p):
        if name in _MATRIX_PARAMS and matmul_dtype != jnp.float32:
            return p.astype(matmul_dtype)
        return p

    args = [maybe_cast(n, params[n]) for n in PARAM_ORDER]

    kernel = functools.partial(
        transformer_block_kernel,
        scale=scale,
        s_real=S,
        matmul_dtype=matmul_dtype,
        approx_recip=approx_softmax_recip)

    # ---- VMEM budget: weights (1 or 2 buffers) + double-buffered x/out tiles
    #      + f32 intermediates, ~30% headroom, clamped to chip capacity. ------
    weight_bytes = sum(int(a.size) * a.dtype.itemsize for a in args)
    tile_bytes = bt * s_pad * D * x_p.dtype.itemsize
    inter_bytes = 4 * bt * s_pad * (13 * D + 2 * s_pad)   # qkv/q/k/v/mh/x0/h/y + attn/p
    est = ((1 if single_buffer_weights else 2) * weight_bytes
           + 4 * tile_bytes + inter_bytes)
    vmem_limit = max(int(est * 1.3), 32 * _MIB)
    try:
        phys = pltpu.get_tpu_info().vmem_capacity_bytes
    except Exception:
        phys = 128 * _MIB
    vmem_limit = min(vmem_limit, int(phys * 0.9))

    # ---- Advisory cost estimate for XLA's scheduler --------------------------
    flops_proj = 2 * bt * s_pad * D * (3 * D + D + 4 * D + 4 * D)   # qkv/proj/w1/w2
    flops_attn = 4 * bt * s_pad * s_pad * D                         # q@k^T and p@v
    cost = pl.CostEstimate(
        flops=int(grid[0] * (flops_proj + flops_attn)),
        transcendentals=int(grid[0] * bt * s_pad * (s_pad + 2)),
        bytes_accessed=int(2 * x_p.size * x_p.dtype.itemsize + weight_bytes))

    def build(single_buffer):
        def wspec(p):
            idx = lambda b: (0,) * p.ndim
            if single_buffer:
                # Constant index_map => block never changes between grid steps:
                # one VMEM copy (instead of the default two) halves residency.
                return pl.BlockSpec(p.shape, idx, pipeline_mode=pl.Buffered(1))
            return pl.BlockSpec(p.shape, idx)

        in_specs = [pl.BlockSpec((bt, s_pad, D), lambda b: (b, 0, 0))]
        in_specs += [wspec(p) for p in args]

        return pl.pallas_call(
            kernel,
            out_shape=jax.ShapeDtypeStruct((B, s_pad, D), x.dtype),
            grid=grid,
            in_specs=in_specs,
            out_specs=pl.BlockSpec((bt, s_pad, D), lambda b: (b, 0, 0)),
            compiler_params=pltpu.CompilerParams(
                dimension_semantics=("parallel",),
                vmem_limit_bytes=vmem_limit),
            cost_estimate=cost,
        )

    try:
        out = build(single_buffer_weights)(x_p, *args)
    except Exception:
        if not single_buffer_weights:
            raise
        # Fallback for JAX versions that reject Buffered(1) on a constant-index
        # BlockSpec: default double-buffering (correct, just more VMEM).
        out = build(False)(x_p, *args)

    return out if s_pad == S else out[:, :S, :]


def init_params(key, dim):
    """Deterministic PyTorch-Linear-style init (uniform +/- 1/sqrt(fan_in))."""
    keys = jax.random.split(key, 4)

    def lin(k, fan_in, fan_out):
        bound = 1.0 / (fan_in ** 0.5)
        kw, kb = jax.random.split(k)
        w = jax.random.uniform(kw, (fan_in, fan_out), jnp.float32, -bound, bound)
        b = jax.random.uniform(kb, (1, fan_out), jnp.float32, -bound, bound)
        return w, b

    wqkv, bqkv = lin(keys[0], dim, 3 * dim)     # fused qkv (Linear(dim, 3*dim))
    wproj, bproj = lin(keys[1], dim, dim)
    w1, b1 = lin(keys[2], dim, 4 * dim)
    w2, b2 = lin(keys[3], 4 * dim, dim)

    return {
        "wqkv": wqkv, "bqkv": bqkv,
        "wproj": wproj, "bproj": bproj,
        "g0": jnp.ones((1, dim), jnp.float32), "beta0": jnp.zeros((1, dim), jnp.float32),
        "w1": w1, "b1": b1, "w2": w2, "b2": b2,
        "g1": jnp.ones((1, dim), jnp.float32), "beta1": jnp.zeros((1, dim), jnp.float32),
    }


def transformer_block_ref(x, p, head):
    """Pure-JAX reference mirroring the PyTorch forward exactly."""
    D = x.shape[-1]
    scale = (D // head) ** (-0.5)
    qkv = x @ p["wqkv"] + p["bqkv"]
    q, k, v = qkv[..., :D], qkv[..., D:2 * D], qkv[..., 2 * D:]
    attn = jax.nn.softmax((q @ jnp.swapaxes(k, -1, -2)) * scale, axis=-1)
    mh = (attn @ v) @ p["wproj"] + p["bproj"]
    x1 = mh + x

    def ln(z, g, b):
        m = jnp.mean(z, -1, keepdims=True)
        v_ = jnp.mean((z - m) ** 2, -1, keepdims=True)
        return (z - m) / jnp.sqrt(v_ + 1e-5) * g + b

    x0 = ln(x1, p["g0"], p["beta0"])
    h = jnp.maximum(x0 @ p["w1"] + p["b1"], 0.0)
    y = h @ p["w2"] + p["b2"] + x0
    return ln(y, p["g1"], p["beta1"])


if __name__ == "__main__":
    B, S, D, HEAD = 2, 8, 32, 4   # (batch, patch_num, dim), head_num=4

    key = jax.random.PRNGKey(0)
    kx, kp = jax.random.split(key)
    x = jax.random.normal(kx, (B, S, D), jnp.float32)
    params = init_params(kp, D)
    ref = transformer_block_ref(x, params, HEAD)

    # f32 path: strict check against the pure-JAX reference.
    out = transformer_block(x, params, HEAD, matmul_dtype=jnp.float32)
    jax.block_until_ready(out)
    assert out.shape == (B, S, D)
    assert jnp.allclose(out, ref, atol=1e-4, rtol=1e-4), "f32 mismatch vs. reference"

    # bf16-at-the-MXU path (f32 accumulation / softmax / LayerNorm stats),
    # with the EUP approximate reciprocal enabled explicitly.
    out_bf16 = transformer_block(x, params, HEAD, matmul_dtype=jnp.bfloat16,
                                 approx_softmax_recip=True)
    jax.block_until_ready(out_bf16)
    assert jnp.allclose(out_bf16, ref, atol=5e-2, rtol=5e-2), "bf16 mismatch vs. reference"

    # Non-multiple-of-8 sequence length exercises the padding + key-mask path.
    S2 = 6
    x2 = jax.random.normal(jax.random.PRNGKey(1), (B, S2, D), jnp.float32)
    out2 = transformer_block(x2, params, HEAD, matmul_dtype=jnp.float32)
    jax.block_until_ready(out2)
    assert out2.shape == (B, S2, D)
    assert jnp.allclose(out2, transformer_block_ref(x2, params, HEAD),
                        atol=1e-4, rtol=1e-4), "padded-S mismatch vs. reference"

    print("KERNEL_OK")
</pallas_src>

<mosaic_0001>
module attributes {stable_mosaic.version = 11 : i64} {
  func.func @transformer_block_kernel(%arg0: i32, %arg1: memref<1x8x32xf32, #tpu.memory_space<vmem>>, %arg2: memref<32x96xf32, #tpu.memory_space<vmem>>, %arg3: memref<1x96xf32, #tpu.memory_space<vmem>>, %arg4: memref<32x32xf32, #tpu.memory_space<vmem>>, %arg5: memref<1x32xf32, #tpu.memory_space<vmem>>, %arg6: memref<1x32xf32, #tpu.memory_space<vmem>>, %arg7: memref<1x32xf32, #tpu.memory_space<vmem>>, %arg8: memref<32x128xf32, #tpu.memory_space<vmem>>, %arg9: memref<1x128xf32, #tpu.memory_space<vmem>>, %arg10: memref<128x32xf32, #tpu.memory_space<vmem>>, %arg11: memref<1x32xf32, #tpu.memory_space<vmem>>, %arg12: memref<1x32xf32, #tpu.memory_space<vmem>>, %arg13: memref<1x32xf32, #tpu.memory_space<vmem>>, %arg14: memref<1x8x32xf32, #tpu.memory_space<vmem>>) attributes {dimension_semantics = [#tpu.dimension_semantics<parallel>], iteration_bounds = array<i64: 2>, scalar_prefetch = 0 : i64, scratch_operands = 0 : i64, tpu.core_type = #tpu.core_type<tc>, window_params = [{transform_indices = @transform_0, window_bounds = array<i64: 1, 8, 32>}, {pipeline_mode = #tpu.pipeline_mode<synchronous>, transform_indices = @transform_1, window_bounds = array<i64: 32, 96>}, {pipeline_mode = #tpu.pipeline_mode<synchronous>, transform_indices = @transform_2, window_bounds = array<i64: 1, 96>}, {pipeline_mode = #tpu.pipeline_mode<synchronous>, transform_indices = @transform_3, window_bounds = array<i64: 32, 32>}, {pipeline_mode = #tpu.pipeline_mode<synchronous>, transform_indices = @transform_4, window_bounds = array<i64: 1, 32>}, {pipeline_mode = #tpu.pipeline_mode<synchronous>, transform_indices = @transform_5, window_bounds = array<i64: 1, 32>}, {pipeline_mode = #tpu.pipeline_mode<synchronous>, transform_indices = @transform_6, window_bounds = array<i64: 1, 32>}, {pipeline_mode = #tpu.pipeline_mode<synchronous>, transform_indices = @transform_7, window_bounds = array<i64: 32, 128>}, {pipeline_mode = #tpu.pipeline_mode<synchronous>, transform_indices = @transform_8, window_bounds = array<i64: 1, 128>}, {pipeline_mode = #tpu.pipeline_mode<synchronous>, transform_indices = @transform_9, window_bounds = array<i64: 128, 32>}, {pipeline_mode = #tpu.pipeline_mode<synchronous>, transform_indices = @transform_10, window_bounds = array<i64: 1, 32>}, {pipeline_mode = #tpu.pipeline_mode<synchronous>, transform_indices = @transform_11, window_bounds = array<i64: 1, 32>}, {pipeline_mode = #tpu.pipeline_mode<synchronous>, transform_indices = @transform_12, window_bounds = array<i64: 1, 32>}, {transform_indices = @transform_13, window_bounds = array<i64: 1, 8, 32>}]} {
    %c0 = arith.constant 0 : index
    %c0_0 = arith.constant 0 : index
    %c0_1 = arith.constant 0 : index
    %0 = vector.load %arg1[%c0, %c0_0, %c0_1] : memref<1x8x32xf32, #tpu.memory_space<vmem>>, vector<1x8x32xf32>
    %1 = vector.shape_cast %0 : vector<1x8x32xf32> to vector<8x32xf32>
    %c0_2 = arith.constant 0 : index
    %c0_3 = arith.constant 0 : index
    %2 = vector.load %arg2[%c0_2, %c0_3] : memref<32x96xf32, #tpu.memory_space<vmem>>, vector<32x96xf32>
    %cst = arith.constant dense<0.000000e+00> : vector<8x96xf32>
    %3 = tpu.matmul %1, %2, %cst {dimension_numbers = #tpu.dot_dimension_numbers<[1], [0], [0], [1], [0, 0, 1, 1], [], []>} : vector<8x32xf32>, vector<32x96xf32>, vector<8x96xf32> -> vector<8x96xf32>
    %c0_4 = arith.constant 0 : index
    %c0_5 = arith.constant 0 : index
    %4 = vector.load %arg3[%c0_4, %c0_5] : memref<1x96xf32, #tpu.memory_space<vmem>>, vector<1x96xf32>
    %5 = vector.broadcast %4 : vector<1x96xf32> to vector<8x96xf32>
    %6 = arith.addf %3, %5 : vector<8x96xf32>
    %7 = vector.extract_strided_slice %6 {offsets = [0, 0], sizes = [8, 32], strides = [1, 1]} : vector<8x96xf32> to vector<8x32xf32>
    %8 = vector.shape_cast %7 : vector<8x32xf32> to vector<1x8x32xf32>
    %cst_6 = arith.constant 0.353553385 : f32
    %9 = vector.broadcast %cst_6 : f32 to vector<1x8x32xf32>
    %10 = arith.mulf %8, %9 : vector<1x8x32xf32>
    %11 = vector.extract_strided_slice %6 {offsets = [0, 32], sizes = [8, 32], strides = [1, 1]} : vector<8x96xf32> to vector<8x32xf32>
    %12 = vector.shape_cast %11 : vector<8x32xf32> to vector<1x8x32xf32>
    %13 = vector.extract_strided_slice %6 {offsets = [0, 64], sizes = [8, 32], strides = [1, 1]} : vector<8x96xf32> to vector<8x32xf32>
    %14 = vector.shape_cast %13 : vector<8x32xf32> to vector<1x8x32xf32>
    "tpu.trace_start"() <{level = 10 : i32, message = "bqd,bkd->bqk"}> : () -> ()
    %cst_7 = arith.constant dense<0.000000e+00> : vector<1x8x8xf32>
    %15 = tpu.matmul %10, %12, %cst_7 {dimension_numbers = #tpu.dot_dimension_numbers<[2], [2], [1], [1], [0, 0, 0, 1, 1, 1], [0], [0]>} : vector<1x8x32xf32>, vector<1x8x32xf32>, vector<1x8x8xf32> -> vector<1x8x8xf32>
    "tpu.trace_stop"() : () -> ()
    %cst_8 = arith.constant dense<0xFF800000> : vector<1x8xf32>
    %16 = vector.multi_reduction <maximumf>, %15, %cst_8 [2] : vector<1x8x8xf32> to vector<1x8xf32>
    %17 = vector.shape_cast %16 : vector<1x8xf32> to vector<1x8x1xf32>
    %18 = vector.broadcast %17 : vector<1x8x1xf32> to vector<1x8x8xf32>
    %19 = arith.subf %15, %18 : vector<1x8x8xf32>
    %20 = math.exp %19 : vector<1x8x8xf32>
    %cst_9 = arith.constant dense<0.000000e+00> : vector<1x8xf32>
    %21 = vector.multi_reduction <add>, %20, %cst_9 [2] : vector<1x8x8xf32> to vector<1x8xf32>
    %22 = vector.shape_cast %21 : vector<1x8xf32> to vector<1x8x1xf32>
    %23 = tpu.reciprocal %22 : vector<1x8x1xf32> -> vector<1x8x1xf32>
    %24 = vector.broadcast %23 : vector<1x8x1xf32> to vector<1x8x8xf32>
    %25 = arith.mulf %20, %24 : vector<1x8x8xf32>
    "tpu.trace_start"() <{level = 10 : i32, message = "bqk,bkd->bqd"}> : () -> ()
    %cst_10 = arith.constant dense<0.000000e+00> : vector<1x8x32xf32>
    %26 = tpu.matmul %25, %14, %cst_10 {dimension_numbers = #tpu.dot_dimension_numbers<[2], [1], [1], [2], [0, 0, 0, 1, 1, 2], [0], [0]>} : vector<1x8x8xf32>, vector<1x8x32xf32>, vector<1x8x32xf32> -> vector<1x8x32xf32>
    "tpu.trace_stop"() : () -> ()
    %27 = vector.shape_cast %26 : vector<1x8x32xf32> to vector<8x32xf32>
    %c0_11 = arith.constant 0 : index
    %c0_12 = arith.constant 0 : index
    %28 = vector.load %arg4[%c0_11, %c0_12] : memref<32x32xf32, #tpu.memory_space<vmem>>, vector<32x32xf32>
    %cst_13 = arith.constant dense<0.000000e+00> : vector<8x32xf32>
    %29 = tpu.matmul %27, %28, %cst_13 {dimension_numbers = #tpu.dot_dimension_numbers<[1], [0], [0], [1], [0, 0, 1, 1], [], []>} : vector<8x32xf32>, vector<32x32xf32>, vector<8x32xf32> -> vector<8x32xf32>
    %c0_14 = arith.constant 0 : index
    %c0_15 = arith.constant 0 : index
    %30 = vector.load %arg5[%c0_14, %c0_15] : memref<1x32xf32, #tpu.memory_space<vmem>>, vector<1x32xf32>
    %31 = vector.broadcast %30 : vector<1x32xf32> to vector<8x32xf32>
    %32 = arith.addf %29, %31 : vector<8x32xf32>
    %33 = arith.addf %32, %1 : vector<8x32xf32>
    %c0_16 = arith.constant 0 : index
    %c0_17 = arith.constant 0 : index
    %34 = vector.load %arg6[%c0_16, %c0_17] : memref<1x32xf32, #tpu.memory_space<vmem>>, vector<1x32xf32>
    %c0_18 = arith.constant 0 : index
    %c0_19 = arith.constant 0 : index
    %35 = vector.load %arg7[%c0_18, %c0_19] : memref<1x32xf32, #tpu.memory_space<vmem>>, vector<1x32xf32>
    %cst_20 = arith.constant dense<0.000000e+00> : vector<8xf32>
    %36 = vector.multi_reduction <add>, %33, %cst_20 [1] : vector<8x32xf32> to vector<8xf32>
    %37 = vector.shape_cast %36 : vector<8xf32> to vector<8x1xf32>
    %cst_21 = arith.constant 3.200000e+01 : f32
    %38 = vector.broadcast %cst_21 : f32 to vector<8x1xf32>
    %39 = arith.divf %37, %38 : vector<8x1xf32>
    %40 = vector.broadcast %39 : vector<8x1xf32> to vector<8x32xf32>
    %41 = arith.subf %33, %40 : vector<8x32xf32>
    %42 = arith.mulf %41, %41 : vector<8x32xf32>
    %cst_22 = arith.constant dense<0.000000e+00> : vector<8xf32>
    %43 = vector.multi_reduction <add>, %42, %cst_22 [1] : vector<8x32xf32> to vector<8xf32>
    %44 = vector.shape_cast %43 : vector<8xf32> to vector<8x1xf32>
    %cst_23 = arith.constant 3.200000e+01 : f32
    %45 = vector.broadcast %cst_23 : f32 to vector<8x1xf32>
    %46 = arith.divf %44, %45 : vector<8x1xf32>
    %47 = vector.broadcast %39 : vector<8x1xf32> to vector<8x32xf32>
    %48 = arith.subf %33, %47 : vector<8x32xf32>
    %cst_24 = arith.constant 9.99999974E-6 : f32
    %49 = vector.broadcast %cst_24 : f32 to vector<8x1xf32>
    %50 = arith.addf %46, %49 : vector<8x1xf32>
    %51 = math.rsqrt %50 : vector<8x1xf32>
    %52 = vector.broadcast %51 : vector<8x1xf32> to vector<8x32xf32>
    %53 = arith.mulf %48, %52 : vector<8x32xf32>
    %54 = vector.broadcast %34 : vector<1x32xf32> to vector<8x32xf32>
    %55 = arith.mulf %53, %54 : vector<8x32xf32>
    %56 = vector.broadcast %35 : vector<1x32xf32> to vector<8x32xf32>
    %57 = arith.addf %55, %56 : vector<8x32xf32>
    %c0_25 = arith.constant 0 : index
    %c0_26 = arith.constant 0 : index
    %58 = vector.load %arg8[%c0_25, %c0_26] : memref<32x128xf32, #tpu.memory_space<vmem>>, vector<32x128xf32>
    %cst_27 = arith.constant dense<0.000000e+00> : vector<8x128xf32>
    %59 = tpu.matmul %57, %58, %cst_27 {dimension_numbers = #tpu.dot_dimension_numbers<[1], [0], [0], [1], [0, 0, 1, 1], [], []>} : vector<8x32xf32>, vector<32x128xf32>, vector<8x128xf32> -> vector<8x128xf32>
    %c0_28 = arith.constant 0 : index
    %c0_29 = arith.constant 0 : index
    %60 = vector.load %arg9[%c0_28, %c0_29] : memref<1x128xf32, #tpu.memory_space<vmem>>, vector<1x128xf32>
    %61 = vector.broadcast %60 : vector<1x128xf32> to vector<8x128xf32>
    %62 = arith.addf %59, %61 : vector<8x128xf32>
    %cst_30 = arith.constant 0.000000e+00 : f32
    %63 = vector.broadcast %cst_30 : f32 to vector<8x128xf32>
    %64 = arith.maximumf %62, %63 : vector<8x128xf32>
    %c0_31 = arith.constant 0 : index
    %c0_32 = arith.constant 0 : index
    %65 = vector.load %arg10[%c0_31, %c0_32] : memref<128x32xf32, #tpu.memory_space<vmem>>, vector<128x32xf32>
    %cst_33 = arith.constant dense<0.000000e+00> : vector<8x32xf32>
    %66 = tpu.matmul %64, %65, %cst_33 {dimension_numbers = #tpu.dot_dimension_numbers<[1], [0], [0], [1], [0, 0, 1, 1], [], []>} : vector<8x128xf32>, vector<128x32xf32>, vector<8x32xf32> -> vector<8x32xf32>
    %c0_34 = arith.constant 0 : index
    %c0_35 = arith.constant 0 : index
    %67 = vector.load %arg11[%c0_34, %c0_35] : memref<1x32xf32, #tpu.memory_space<vmem>>, vector<1x32xf32>
    %68 = vector.broadcast %67 : vector<1x32xf32> to vector<8x32xf32>
    %69 = arith.addf %66, %68 : vector<8x32xf32>
    %70 = arith.addf %69, %57 : vector<8x32xf32>
    %c0_36 = arith.constant 0 : index
    %c0_37 = arith.constant 0 : index
    %71 = vector.load %arg12[%c0_36, %c0_37] : memref<1x32xf32, #tpu.memory_space<vmem>>, vector<1x32xf32>
    %c0_38 = arith.constant 0 : index
    %c0_39 = arith.constant 0 : index
    %72 = vector.load %arg13[%c0_38, %c0_39] : memref<1x32xf32, #tpu.memory_space<vmem>>, vector<1x32xf32>
    %cst_40 = arith.constant dense<0.000000e+00> : vector<8xf32>
    %73 = vector.multi_reduction <add>, %70, %cst_40 [1] : vector<8x32xf32> to vector<8xf32>
    %74 = vector.shape_cast %73 : vector<8xf32> to vector<8x1xf32>
    %cst_41 = arith.constant 3.200000e+01 : f32
    %75 = vector.broadcast %cst_41 : f32 to vector<8x1xf32>
    %76 = arith.divf %74, %75 : vector<8x1xf32>
    %77 = vector.broadcast %76 : vector<8x1xf32> to vector<8x32xf32>
    %78 = arith.subf %70, %77 : vector<8x32xf32>
    %79 = arith.mulf %78, %78 : vector<8x32xf32>
    %cst_42 = arith.constant dense<0.000000e+00> : vector<8xf32>
    %80 = vector.multi_reduction <add>, %79, %cst_42 [1] : vector<8x32xf32> to vector<8xf32>
    %81 = vector.shape_cast %80 : vector<8xf32> to vector<8x1xf32>
    %cst_43 = arith.constant 3.200000e+01 : f32
    %82 = vector.broadcast %cst_43 : f32 to vector<8x1xf32>
    %83 = arith.divf %81, %82 : vector<8x1xf32>
    %84 = vector.broadcast %76 : vector<8x1xf32> to vector<8x32xf32>
    %85 = arith.subf %70, %84 : vector<8x32xf32>
    %cst_44 = arith.constant 9.99999974E-6 : f32
    %86 = vector.broadcast %cst_44 : f32 to vector<8x1xf32>
    %87 = arith.addf %83, %86 : vector<8x1xf32>
    %88 = math.rsqrt %87 : vector<8x1xf32>
    %89 = vector.broadcast %88 : vector<8x1xf32> to vector<8x32xf32>
    %90 = arith.mulf %85, %89 : vector<8x32xf32>
    %91 = vector.broadcast %71 : vector<1x32xf32> to vector<8x32xf32>
    %92 = arith.mulf %90, %91 : vector<8x32xf32>
    %93 = vector.broadcast %72 : vector<1x32xf32> to vector<8x32xf32>
    %94 = arith.addf %92, %93 : vector<8x32xf32>
    %95 = vector.shape_cast %94 : vector<8x32xf32> to vector<1x8x32xf32>
    %c0_45 = arith.constant 0 : index
    %c0_46 = arith.constant 0 : index
    %c0_47 = arith.constant 0 : index
    %96 = vector.load %arg14[%c0_45, %c0_46, %c0_47] : memref<1x8x32xf32, #tpu.memory_space<vmem>>, vector<1x8x32xf32>
    tpu.vector_store %arg14[%c0_45, %c0_46, %c0_47], %95 {strides = array<i32>} : memref<1x8x32xf32, #tpu.memory_space<vmem>>, vector<1x8x32xf32>,
    return
  }
  func.func @transform_0(%arg0: i32) -> (i32, i32, i32) {
    %c0_i32 = arith.constant 0 : i32
    %c0_i32_0 = arith.constant 0 : i32
    %c0_i32_1 = arith.constant 0 : i32
    return %arg0, %c0_i32, %c0_i32_0 : i32, i32, i32
  }
  func.func @transform_1(%arg0: i32) -> (i32, i32) {
    %c0_i32 = arith.constant 0 : i32
    %c0_i32_0 = arith.constant 0 : i32
    %c0_i32_1 = arith.constant 0 : i32
    return %c0_i32, %c0_i32_0 : i32, i32
  }
  func.func @transform_2(%arg0: i32) -> (i32, i32) {
    %c0_i32 = arith.constant 0 : i32
    %c0_i32_0 = arith.constant 0 : i32
    %c0_i32_1 = arith.constant 0 : i32
    return %c0_i32, %c0_i32_0 : i32, i32
  }
  func.func @transform_3(%arg0: i32) -> (i32, i32) {
    %c0_i32 = arith.constant 0 : i32
    %c0_i32_0 = arith.constant 0 : i32
    %c0_i32_1 = arith.constant 0 : i32
    return %c0_i32, %c0_i32_0 : i32, i32
  }
  func.func @transform_4(%arg0: i32) -> (i32, i32) {
    %c0_i32 = arith.constant 0 : i32
    %c0_i32_0 = arith.constant 0 : i32
    %c0_i32_1 = arith.constant 0 : i32
    return %c0_i32, %c0_i32_0 : i32, i32
  }
  func.func @transform_5(%arg0: i32) -> (i32, i32) {
    %c0_i32 = arith.constant 0 : i32
    %c0_i32_0 = arith.constant 0 : i32
    %c0_i32_1 = arith.constant 0 : i32
    return %c0_i32, %c0_i32_0 : i32, i32
  }
  func.func @transform_6(%arg0: i32) -> (i32, i32) {
    %c0_i32 = arith.constant 0 : i32
    %c0_i32_0 = arith.constant 0 : i32
    %c0_i32_1 = arith.constant 0 : i32
    return %c0_i32, %c0_i32_0 : i32, i32
  }
  func.func @transform_7(%arg0: i32) -> (i32, i32) {
    %c0_i32 = arith.constant 0 : i32
    %c0_i32_0 = arith.constant 0 : i32
    %c0_i32_1 = arith.constant 0 : i32
    return %c0_i32, %c0_i32_0 : i32, i32
  }
  func.func @transform_8(%arg0: i32) -> (i32, i32) {
    %c0_i32 = arith.constant 0 : i32
    %c0_i32_0 = arith.constant 0 : i32
    %c0_i32_1 = arith.constant 0 : i32
    return %c0_i32, %c0_i32_0 : i32, i32
  }
  func.func @transform_9(%arg0: i32) -> (i32, i32) {
    %c0_i32 = arith.constant 0 : i32
    %c0_i32_0 = arith.constant 0 : i32
    %c0_i32_1 = arith.constant 0 : i32
    return %c0_i32, %c0_i32_0 : i32, i32
  }
  func.func @transform_10(%arg0: i32) -> (i32, i32) {
    %c0_i32 = arith.constant 0 : i32
    %c0_i32_0 = arith.constant 0 : i32
    %c0_i32_1 = arith.constant 0 : i32
    return %c0_i32, %c0_i32_0 : i32, i32
  }
  func.func @transform_11(%arg0: i32) -> (i32, i32) {
    %c0_i32 = arith.constant 0 : i32
    %c0_i32_0 = arith.constant 0 : i32
    %c0_i32_1 = arith.constant 0 : i32
    return %c0_i32, %c0_i32_0 : i32, i32
  }
  func.func @transform_12(%arg0: i32) -> (i32, i32) {
    %c0_i32 = arith.constant 0 : i32
    %c0_i32_0 = arith.constant 0 : i32
    %c0_i32_1 = arith.constant 0 : i32
    return %c0_i32, %c0_i32_0 : i32, i32
  }
  func.func @transform_13(%arg0: i32) -> (i32, i32, i32) {
    %c0_i32 = arith.constant 0 : i32
    %c0_i32_0 = arith.constant 0 : i32
    %c0_i32_1 = arith.constant 0 : i32
    return %arg0, %c0_i32, %c0_i32_0 : i32, i32, i32
  }
}

module attributes {stable_mosaic.version = 11 : i64} {
  func.func @transformer_block_kernel(%arg0: i32, %arg1: memref<1x8x32xf32, #tpu.memory_space<vmem>>, %arg2: memref<32x96xf32, #tpu.memory_space<vmem>>, %arg3: memref<1x96xf32, #tpu.memory_space<vmem>>, %arg4: memref<32x32xf32, #tpu.memory_space<vmem>>, %arg5: memref<1x32xf32, #tpu.memory_space<vmem>>, %arg6: memref<1x32xf32, #tpu.memory_space<vmem>>, %arg7: memref<1x32xf32, #tpu.memory_space<vmem>>, %arg8: memref<32x128xf32, #tpu.memory_space<vmem>>, %arg9: memref<1x128xf32, #tpu.memory_space<vmem>>, %arg10: memref<128x32xf32, #tpu.memory_space<vmem>>, %arg11: memref<1x32xf32, #tpu.memory_space<vmem>>, %arg12: memref<1x32xf32, #tpu.memory_space<vmem>>, %arg13: memref<1x32xf32, #tpu.memory_space<vmem>>, %arg14: memref<1x8x32xf32, #tpu.memory_space<vmem>>) attributes {dimension_semantics = [#tpu.dimension_semantics<parallel>], iteration_bounds = array<i64: 2>, scalar_prefetch = 0 : i64, scratch_operands = 0 : i64, tpu.core_type = #tpu.core_type<tc>, window_params = [{transform_indices = @transform_0, window_bounds = array<i64: 1, 8, 32>}, {pipeline_mode = #tpu.pipeline_mode<synchronous>, transform_indices = @transform_1, window_bounds = array<i64: 32, 96>}, {pipeline_mode = #tpu.pipeline_mode<synchronous>, transform_indices = @transform_2, window_bounds = array<i64: 1, 96>}, {pipeline_mode = #tpu.pipeline_mode<synchronous>, transform_indices = @transform_3, window_bounds = array<i64: 32, 32>}, {pipeline_mode = #tpu.pipeline_mode<synchronous>, transform_indices = @transform_4, window_bounds = array<i64: 1, 32>}, {pipeline_mode = #tpu.pipeline_mode<synchronous>, transform_indices = @transform_5, window_bounds = array<i64: 1, 32>}, {pipeline_mode = #tpu.pipeline_mode<synchronous>, transform_indices = @transform_6, window_bounds = array<i64: 1, 32>}, {pipeline_mode = #tpu.pipeline_mode<synchronous>, transform_indices = @transform_7, window_bounds = array<i64: 32, 128>}, {pipeline_mode = #tpu.pipeline_mode<synchronous>, transform_indices = @transform_8, window_bounds = array<i64: 1, 128>}, {pipeline_mode = #tpu.pipeline_mode<synchronous>, transform_indices = @transform_9, window_bounds = array<i64: 128, 32>}, {pipeline_mode = #tpu.pipeline_mode<synchronous>, transform_indices = @transform_10, window_bounds = array<i64: 1, 32>}, {pipeline_mode = #tpu.pipeline_mode<synchronous>, transform_indices = @transform_11, window_bounds = array<i64: 1, 32>}, {pipeline_mode = #tpu.pipeline_mode<synchronous>, transform_indices = @transform_12, window_bounds = array<i64: 1, 32>}, {transform_indices = @transform_13, window_bounds = array<i64: 1, 8, 32>}]} {
    %c0 = arith.constant 0 : index
    %c0_0 = arith.constant 0 : index
    %c0_1 = arith.constant 0 : index
    %0 = vector.load %arg1[%c0, %c0_0, %c0_1] : memref<1x8x32xf32, #tpu.memory_space<vmem>>, vector<1x8x32xf32>
    %1 = vector.shape_cast %0 : vector<1x8x32xf32> to vector<8x32xf32>
    %c0_2 = arith.constant 0 : index
    %c0_3 = arith.constant 0 : index
    %2 = vector.load %arg2[%c0_2, %c0_3] : memref<32x96xf32, #tpu.memory_space<vmem>>, vector<32x96xf32>
    %cst = arith.constant dense<0.000000e+00> : vector<8x96xf32>
    %3 = tpu.matmul %1, %2, %cst {dimension_numbers = #tpu.dot_dimension_numbers<[1], [0], [0], [1], [0, 0, 1, 1], [], []>} : vector<8x32xf32>, vector<32x96xf32>, vector<8x96xf32> -> vector<8x96xf32>
    %c0_4 = arith.constant 0 : index
    %c0_5 = arith.constant 0 : index
    %4 = vector.load %arg3[%c0_4, %c0_5] : memref<1x96xf32, #tpu.memory_space<vmem>>, vector<1x96xf32>
    %5 = vector.broadcast %4 : vector<1x96xf32> to vector<8x96xf32>
    %6 = arith.addf %3, %5 : vector<8x96xf32>
    %7 = vector.extract_strided_slice %6 {offsets = [0, 0], sizes = [8, 32], strides = [1, 1]} : vector<8x96xf32> to vector<8x32xf32>
    %8 = vector.shape_cast %7 : vector<8x32xf32> to vector<1x8x32xf32>
    %cst_6 = arith.constant 0.353553385 : f32
    %9 = vector.broadcast %cst_6 : f32 to vector<1x8x32xf32>
    %10 = arith.mulf %8, %9 : vector<1x8x32xf32>
    %11 = vector.extract_strided_slice %6 {offsets = [0, 32], sizes = [8, 32], strides = [1, 1]} : vector<8x96xf32> to vector<8x32xf32>
    %12 = vector.shape_cast %11 : vector<8x32xf32> to vector<1x8x32xf32>
    %13 = vector.extract_strided_slice %6 {offsets = [0, 64], sizes = [8, 32], strides = [1, 1]} : vector<8x96xf32> to vector<8x32xf32>
    %14 = vector.shape_cast %13 : vector<8x32xf32> to vector<1x8x32xf32>
    "tpu.trace_start"() <{level = 10 : i32, message = "bqd,bkd->bqk"}> : () -> ()
    %cst_7 = arith.constant dense<0.000000e+00> : vector<1x8x8xf32>
    %15 = tpu.matmul %10, %12, %cst_7 {dimension_numbers = #tpu.dot_dimension_numbers<[2], [2], [1], [1], [0, 0, 0, 1, 1, 1], [0], [0]>} : vector<1x8x32xf32>, vector<1x8x32xf32>, vector<1x8x8xf32> -> vector<1x8x8xf32>
    "tpu.trace_stop"() : () -> ()
    %cst_8 = arith.constant dense<0xFF800000> : vector<1x8xf32>
    %16 = vector.multi_reduction <maximumf>, %15, %cst_8 [2] : vector<1x8x8xf32> to vector<1x8xf32>
    %17 = vector.shape_cast %16 : vector<1x8xf32> to vector<1x8x1xf32>
    %18 = vector.broadcast %17 : vector<1x8x1xf32> to vector<1x8x8xf32>
    %19 = arith.subf %15, %18 : vector<1x8x8xf32>
    %20 = math.exp %19 : vector<1x8x8xf32>
    %cst_9 = arith.constant dense<0.000000e+00> : vector<1x8xf32>
    %21 = vector.multi_reduction <add>, %20, %cst_9 [2] : vector<1x8x8xf32> to vector<1x8xf32>
    %22 = vector.shape_cast %21 : vector<1x8xf32> to vector<1x8x1xf32>
    %23 = tpu.reciprocal %22 : vector<1x8x1xf32> -> vector<1x8x1xf32>
    %24 = vector.broadcast %23 : vector<1x8x1xf32> to vector<1x8x8xf32>
    %25 = arith.mulf %20, %24 : vector<1x8x8xf32>
    "tpu.trace_start"() <{level = 10 : i32, message = "bqk,bkd->bqd"}> : () -> ()
    %cst_10 = arith.constant dense<0.000000e+00> : vector<1x8x32xf32>
    %26 = tpu.matmul %25, %14, %cst_10 {dimension_numbers = #tpu.dot_dimension_numbers<[2], [1], [1], [2], [0, 0, 0, 1, 1, 2], [0], [0]>} : vector<1x8x8xf32>, vector<1x8x32xf32>, vector<1x8x32xf32> -> vector<1x8x32xf32>
    "tpu.trace_stop"() : () -> ()
    %27 = vector.shape_cast %26 : vector<1x8x32xf32> to vector<8x32xf32>
    %c0_11 = arith.constant 0 : index
    %c0_12 = arith.constant 0 : index
    %28 = vector.load %arg4[%c0_11, %c0_12] : memref<32x32xf32, #tpu.memory_space<vmem>>, vector<32x32xf32>
    %cst_13 = arith.constant dense<0.000000e+00> : vector<8x32xf32>
    %29 = tpu.matmul %27, %28, %cst_13 {dimension_numbers = #tpu.dot_dimension_numbers<[1], [0], [0], [1], [0, 0, 1, 1], [], []>} : vector<8x32xf32>, vector<32x32xf32>, vector<8x32xf32> -> vector<8x32xf32>
    %c0_14 = arith.constant 0 : index
    %c0_15 = arith.constant 0 : index
    %30 = vector.load %arg5[%c0_14, %c0_15] : memref<1x32xf32, #tpu.memory_space<vmem>>, vector<1x32xf32>
    %31 = vector.broadcast %30 : vector<1x32xf32> to vector<8x32xf32>
    %32 = arith.addf %29, %31 : vector<8x32xf32>
    %33 = arith.addf %32, %1 : vector<8x32xf32>
    %c0_16 = arith.constant 0 : index
    %c0_17 = arith.constant 0 : index
    %34 = vector.load %arg6[%c0_16, %c0_17] : memref<1x32xf32, #tpu.memory_space<vmem>>, vector<1x32xf32>
    %c0_18 = arith.constant 0 : index
    %c0_19 = arith.constant 0 : index
    %35 = vector.load %arg7[%c0_18, %c0_19] : memref<1x32xf32, #tpu.memory_space<vmem>>, vector<1x32xf32>
    %cst_20 = arith.constant dense<0.000000e+00> : vector<8xf32>
    %36 = vector.multi_reduction <add>, %33, %cst_20 [1] : vector<8x32xf32> to vector<8xf32>
    %37 = vector.shape_cast %36 : vector<8xf32> to vector<8x1xf32>
    %cst_21 = arith.constant 3.200000e+01 : f32
    %38 = vector.broadcast %cst_21 : f32 to vector<8x1xf32>
    %39 = arith.divf %37, %38 : vector<8x1xf32>
    %40 = vector.broadcast %39 : vector<8x1xf32> to vector<8x32xf32>
    %41 = arith.subf %33, %40 : vector<8x32xf32>
    %42 = arith.mulf %41, %41 : vector<8x32xf32>
    %cst_22 = arith.constant dense<0.000000e+00> : vector<8xf32>
    %43 = vector.multi_reduction <add>, %42, %cst_22 [1] : vector<8x32xf32> to vector<8xf32>
    %44 = vector.shape_cast %43 : vector<8xf32> to vector<8x1xf32>
    %cst_23 = arith.constant 3.200000e+01 : f32
    %45 = vector.broadcast %cst_23 : f32 to vector<8x1xf32>
    %46 = arith.divf %44, %45 : vector<8x1xf32>
    %47 = vector.broadcast %39 : vector<8x1xf32> to vector<8x32xf32>
    %48 = arith.subf %33, %47 : vector<8x32xf32>
    %cst_24 = arith.constant 9.99999974E-6 : f32
    %49 = vector.broadcast %cst_24 : f32 to vector<8x1xf32>
    %50 = arith.addf %46, %49 : vector<8x1xf32>
    %51 = math.rsqrt %50 : vector<8x1xf32>
    %52 = vector.broadcast %51 : vector<8x1xf32> to vector<8x32xf32>
    %53 = arith.mulf %48, %52 : vector<8x32xf32>
    %54 = vector.broadcast %34 : vector<1x32xf32> to vector<8x32xf32>
    %55 = arith.mulf %53, %54 : vector<8x32xf32>
    %56 = vector.broadcast %35 : vector<1x32xf32> to vector<8x32xf32>
    %57 = arith.addf %55, %56 : vector<8x32xf32>
    %c0_25 = arith.constant 0 : index
    %c0_26 = arith.constant 0 : index
    %58 = vector.load %arg8[%c0_25, %c0_26] : memref<32x128xf32, #tpu.memory_space<vmem>>, vector<32x128xf32>
    %cst_27 = arith.constant dense<0.000000e+00> : vector<8x128xf32>
    %59 = tpu.matmul %57, %58, %cst_27 {dimension_numbers = #tpu.dot_dimension_numbers<[1], [0], [0], [1], [0, 0, 1, 1], [], []>} : vector<8x32xf32>, vector<32x128xf32>, vector<8x128xf32> -> vector<8x128xf32>
    %c0_28 = arith.constant 0 : index
    %c0_29 = arith.constant 0 : index
    %60 = vector.load %arg9[%c0_28, %c0_29] : memref<1x128xf32, #tpu.memory_space<vmem>>, vector<1x128xf32>
    %61 = vector.broadcast %60 : vector<1x128xf32> to vector<8x128xf32>
    %62 = arith.addf %59, %61 : vector<8x128xf32>
    %cst_30 = arith.constant 0.000000e+00 : f32
    %63 = vector.broadcast %cst_30 : f32 to vector<8x128xf32>
    %64 = arith.maximumf %62, %63 : vector<8x128xf32>
    %c0_31 = arith.constant 0 : index
    %c0_32 = arith.constant 0 : index
    %65 = vector.load %arg10[%c0_31, %c0_32] : memref<128x32xf32, #tpu.memory_space<vmem>>, vector<128x32xf32>
    %cst_33 = arith.constant dense<0.000000e+00> : vector<8x32xf32>
    %66 = tpu.matmul %64, %65, %cst_33 {dimension_numbers = #tpu.dot_dimension_numbers<[1], [0], [0], [1], [0, 0, 1, 1], [], []>} : vector<8x128xf32>, vector<128x32xf32>, vector<8x32xf32> -> vector<8x32xf32>
    %c0_34 = arith.constant 0 : index
    %c0_35 = arith.constant 0 : index
    %67 = vector.load %arg11[%c0_34, %c0_35] : memref<1x32xf32, #tpu.memory_space<vmem>>, vector<1x32xf32>
    %68 = vector.broadcast %67 : vector<1x32xf32> to vector<8x32xf32>
    %69 = arith.addf %66, %68 : vector<8x32xf32>
    %70 = arith.addf %69, %57 : vector<8x32xf32>
    %c0_36 = arith.constant 0 : index
    %c0_37 = arith.constant 0 : index
    %71 = vector.load %arg12[%c0_36, %c0_37] : memref<1x32xf32, #tpu.memory_space<vmem>>, vector<1x32xf32>
    %c0_38 = arith.constant 0 : index
    %c0_39 = arith.constant 0 : index
    %72 = vector.load %arg13[%c0_38, %c0_39] : memref<1x32xf32, #tpu.memory_space<vmem>>, vector<1x32xf32>
    %cst_40 = arith.constant dense<0.000000e+00> : vector<8xf32>
    %73 = vector.multi_reduction <add>, %70, %cst_40 [1] : vector<8x32xf32> to vector<8xf32>
    %74 = vector.shape_cast %73 : vector<8xf32> to vector<8x1xf32>
    %cst_41 = arith.constant 3.200000e+01 : f32
    %75 = vector.broadcast %cst_41 : f32 to vector<8x1xf32>
    %76 = arith.divf %74, %75 : vector<8x1xf32>
    %77 = vector.broadcast %76 : vector<8x1xf32> to vector<8x32xf32>
    %78 = arith.subf %70, %77 : vector<8x32xf32>
    %79 = arith.mulf %78, %78 : vector<8x32xf32>
    %cst_42 = arith.constant dense<0.000000e+00> : vector<8xf32>
    %80 = vector.multi_reduction <add>, %79, %cst_42 [1] : vector<8x32xf32> to vector<8xf32>
    %81 = vector.shape_cast %80 : vector<8xf32> to vector<8x1xf32>
    %cst_43 = arith.constant 3.200000e+01 : f32
    %82 = vector.broadcast %cst_43 : f32 to vector<8x1xf32>
    %83 = arith.divf %81, %82 : vector<8x1xf32>
    %84 = vector.broadcast %76 : vector<8x1xf32> to vector<8x32xf32>
    %85 = arith.subf %70, %84 : vector<8x32xf32>
    %cst_44 = arith.constant 9.99999974E-6 : f32
    %86 = vector.broadcast %cst_44 : f32 to vector<8x1xf32>
    %87 = arith.addf %83, %86 : vector<8x1xf32>
    %88 = math.rsqrt %87 : vector<8x1xf32>
    %89 = vector.broadcast %88 : vector<8x1xf32> to vector<8x32xf32>
    %90 = arith.mulf %85, %89 : vector<8x32xf32>
    %91 = vector.broadcast %71 : vector<1x32xf32> to vector<8x32xf32>
    %92 = arith.mulf %90, %91 : vector<8x32xf32>
    %93 = vector.broadcast %72 : vector<1x32xf32> to vector<8x32xf32>
    %94 = arith.addf %92, %93 : vector<8x32xf32>
    %95 = vector.shape_cast %94 : vector<8x32xf32> to vector<1x8x32xf32>
    %c0_45 = arith.constant 0 : index
    %c0_46 = arith.constant 0 : index
    %c0_47 = arith.constant 0 : index
    %96 = vector.load %arg14[%c0_45, %c0_46, %c0_47] : memref<1x8x32xf32, #tpu.memory_space<vmem>>, vector<1x8x32xf32>
    tpu.vector_store %arg14[%c0_45, %c0_46, %c0_47], %95 {strides = array<i32>} : memref<1x8x32xf32, #tpu.memory_space<vmem>>, vector<1x8x32xf32>,
    return
  }
  func.func @transform_0(%arg0: i32) -> (i32, i32, i32) {
    %c0_i32 = arith.constant 0 : i32
    %c0_i32_0 = arith.constant 0 : i32
    %c0_i32_1 = arith.constant 0 : i32
    return %arg0, %c0_i32, %c0_i32_0 : i32, i32, i32
  }
  func.func @transform_1(%arg0: i32) -> (i32, i32) {
    %c0_i32 = arith.constant 0 : i32
    %c0_i32_0 = arith.constant 0 : i32
    %c0_i32_1 = arith.constant 0 : i32
    return %c0_i32, %c0_i32_0 : i32, i32
  }
  func.func @transform_2(%arg0: i32) -> (i32, i32) {
    %c0_i32 = arith.constant 0 : i32
    %c0_i32_0 = arith.constant 0 : i32
    %c0_i32_1 = arith.constant 0 : i32
    return %c0_i32, %c0_i32_0 : i32, i32
  }
  func.func @transform_3(%arg0: i32) -> (i32, i32) {
    %c0_i32 = arith.constant 0 : i32
    %c0_i32_0 = arith.constant 0 : i32
    %c0_i32_1 = arith.constant 0 : i32
    return %c0_i32, %c0_i32_0 : i32, i32
  }
  func.func @transform_4(%arg0: i32) -> (i32, i32) {
    %c0_i32 = arith.constant 0 : i32
    %c0_i32_0 = arith.constant 0 : i32
    %c0_i32_1 = arith.constant 0 : i32
    return %c0_i32, %c0_i32_0 : i32, i32
  }
  func.func @transform_5(%arg0: i32) -> (i32, i32) {
    %c0_i32 = arith.constant 0 : i32
    %c0_i32_0 = arith.constant 0 : i32
    %c0_i32_1 = arith.constant 0 : i32
    return %c0_i32, %c0_i32_0 : i32, i32
  }
  func.func @transform_6(%arg0: i32) -> (i32, i32) {
    %c0_i32 = arith.constant 0 : i32
    %c0_i32_0 = arith.constant 0 : i32
    %c0_i32_1 = arith.constant 0 : i32
    return %c0_i32, %c0_i32_0 : i32, i32
  }
  func.func @transform_7(%arg0: i32) -> (i32, i32) {
    %c0_i32 = arith.constant 0 : i32
    %c0_i32_0 = arith.constant 0 : i32
    %c0_i32_1 = arith.constant 0 : i32
    return %c0_i32, %c0_i32_0 : i32, i32
  }
  func.func @transform_8(%arg0: i32) -> (i32, i32) {
    %c0_i32 = arith.constant 0 : i32
    %c0_i32_0 = arith.constant 0 : i32
    %c0_i32_1 = arith.constant 0 : i32
    return %c0_i32, %c0_i32_0 : i32, i32
  }
  func.func @transform_9(%arg0: i32) -> (i32, i32) {
    %c0_i32 = arith.constant 0 : i32
    %c0_i32_0 = arith.constant 0 : i32
    %c0_i32_1 = arith.constant 0 : i32
    return %c0_i32, %c0_i32_0 : i32, i32
  }
  func.func @transform_10(%arg0: i32) -> (i32, i32) {
    %c0_i32 = arith.constant 0 : i32
    %c0_i32_0 = arith.constant 0 : i32
    %c0_i32_1 = arith.constant 0 : i32
    return %c0_i32, %c0_i32_0 : i32, i32
  }
  func.func @transform_11(%arg0: i32) -> (i32, i32) {
    %c0_i32 = arith.constant 0 : i32
    %c0_i32_0 = arith.constant 0 : i32
    %c0_i32_1 = arith.constant 0 : i32
    return %c0_i32, %c0_i32_0 : i32, i32
  }
  func.func @transform_12(%arg0: i32) -> (i32, i32) {
    %c0_i32 = arith.constant 0 : i32
    %c0_i32_0 = arith.constant 0 : i32
    %c0_i32_1 = arith.constant 0 : i32
    return %c0_i32, %c0_i32_0 : i32, i32
  }
  func.func @transform_13(%arg0: i32) -> (i32, i32, i32) {
    %c0_i32 = arith.constant 0 : i32
    %c0_i32_0 = arith.constant 0 : i32
    %c0_i32_1 = arith.constant 0 : i32
    return %arg0, %c0_i32, %c0_i32_0 : i32, i32, i32
  }
}

</mosaic_0001>

<llo_original>
// kernel: tpu_custom_call.1
$region0: #{tpu_custom_call.1}
  #allocation0 [shape = 'u32[]', space=smem, size = 0x4, offset = 0x4, fixed_abs, tag = 'smem constant byte address 0x4 - core index']
  #allocation1 [shape = 'u32[72,128]{1,0:T(1,128)}', space=vmem, size = 0x9000, scoped, tag = 'internal scratch']
  %s0 = inlined_call_operand.vmem [shape: f32[2,8,32], index: 0, kind: input, shape index: {}]
  %s1 = inlined_call_operand.vmem [shape: f32[32,96], index: 1, kind: input, shape index: {}]
  %s2 = inlined_call_operand.vmem [shape: f32[1,96], index: 2, kind: input, shape index: {}]
  %s3 = inlined_call_operand.vmem [shape: f32[32,32], index: 3, kind: input, shape index: {}]
  %s4 = inlined_call_operand.vmem [shape: f32[1,32], index: 4, kind: input, shape index: {}]
  %s5 = inlined_call_operand.vmem [shape: f32[1,32], index: 5, kind: input, shape index: {}]
  %s6 = inlined_call_operand.vmem [shape: f32[1,32], index: 6, kind: input, shape index: {}]
  %s7 = inlined_call_operand.vmem [shape: f32[32,128], index: 7, kind: input, shape index: {}]
  %s8 = inlined_call_operand.vmem [shape: f32[1,128], index: 8, kind: input, shape index: {}]
  %s9 = inlined_call_operand.vmem [shape: f32[128,32], index: 9, kind: input, shape index: {}]
  %s10 = inlined_call_operand.vmem [shape: f32[1,32], index: 10, kind: input, shape index: {}]
  %s11 = inlined_call_operand.vmem [shape: f32[1,32], index: 11, kind: input, shape index: {}]
  %s12 = inlined_call_operand.vmem [shape: f32[1,32], index: 12, kind: input, shape index: {}]
  %s13 = inlined_call_operand.hbm [shape: f32[2,8,32], index: 13, kind: output, shape index: {}]
  %s14 = sld [smem:[#allocation0]]
  $region85: #{tpu_custom_call.1} parent=0
    _
  %s16 = ssub.s32 1, %s14
  %s17 = scalar_select 0, %s16, %s14
  $region1: #{tpu_custom_call.1} parent=0
    #allocation2 [shape = 'u8[8192]{0}', space=vmem, size = 0x2000, scoped, tag = 'output window, operand 0']
    #allocation3 [shape = 's32[2]{0}', space=sflag, size = 0x8, scoped, tag = 'scoped memory for tpu_custom_call.1']
    %18 = vsyncpa [#allocation3], 0
    %s19 = scalar_lea.sflag [#allocation3], 1
    %20 = vsyncpa %s19, 0
    loop: start=0, step=1, limit=4
    $region2: #{tpu_custom_call.1} parent=1 // loop_pre_header
      _
    $region3: #{tpu_custom_call.1} parent=1 // loop_header
      %s22 = sphi 0, %s26
      %p23 = scmp.ge.s32.totalorder %s22, 4
      %s32 = sphi 0, %s34
      %s35 = sphi 0, %s32
      %s36 = sphi 0, %s35
      %s52 = sphi 0, %s36
      %s56 = sphi 0, %s56
      %s58 = sphi 0, %s56
      %s59 = sphi 0, %s58
      %s73 = sphi 0, %s59
      %s77 = sphi 0, %s77
      %s79 = sphi 0, %s77
      %s80 = sphi 0, %s79
      %s94 = sphi 0, %s80
      %s98 = sphi 0, %s98
      %s100 = sphi 0, %s98
      %s101 = sphi 0, %s100
      %s115 = sphi 0, %s101
      %s119 = sphi 0, %s119
      %s121 = sphi 0, %s119
      %s122 = sphi 0, %s121
      %s136 = sphi 0, %s122
      %s140 = sphi 0, %s140
      %s142 = sphi 0, %s140
      %s143 = sphi 0, %s142
      %s157 = sphi 0, %s143
      %s161 = sphi 0, %s161
      %s163 = sphi 0, %s161
      %s164 = sphi 0, %s163
      %s178 = sphi 0, %s164
      %s182 = sphi 0, %s182
      %s184 = sphi 0, %s182
      %s185 = sphi 0, %s184
      %s199 = sphi 0, %s185
      %s203 = sphi 0, %s203
      %s205 = sphi 0, %s203
      %s206 = sphi 0, %s205
      %s220 = sphi 0, %s206
      %s224 = sphi 0, %s224
      %s226 = sphi 0, %s224
      %s227 = sphi 0, %s226
      %s241 = sphi 0, %s227
      %s245 = sphi 0, %s245
      %s247 = sphi 0, %s245
      %s248 = sphi 0, %s247
      %s262 = sphi 0, %s248
      %s266 = sphi 0, %s266
      %s268 = sphi 0, %s266
      %s269 = sphi 0, %s268
      %s283 = sphi 0, %s269
      %s287 = sphi 0, %s287
      %s289 = sphi 0, %s287
      %s290 = sphi 0, %s289
      %s304 = sphi 0, %s290
      %s310 = sphi 0, %s312
      %s313 = sphi 0, %s310
      %s314 = sphi 0, %s313
      %s330 = sphi 0, %s314
    $region4: #{tpu_custom_call.1} parent=1 // loop_header_branch
      %25 = sbr.rel (%p23) target = $region8
    $region5: #{tpu_custom_call.1} parent=1 // loop_body
      %s27 = ssub.s32 %s22, 1
      %s28 = ssub.s32 %s22, 2
      %s29 = sadd.s32 %s22, 1
      %s30 = ssub.s32 %s22, %s29
      %p31 = scmp.eq.s32.totalorder %s30, 0
      %s33 = sadd.s32 %s32, 1
      %s34 = scalar_select %p31, %s32, %s33
      %p37 = pneg %p31
      %p38 = scmp.eq.s32.totalorder %s22, 1
      %p39 = por %p37, %p38
      %p40 = scmp.ne.s32.totalorder %s32, %s35
      %p41 = scmp.eq.s32.totalorder %s22, 0
      %p42 = por %p40, %p41
      %p43 = scmp.ne.s32.totalorder %s32, %s35
      %p44 = scmp.eq.s32.totalorder %s27, 1
      %p45 = por %p43, %p44
      %p46 = scmp.ne.s32.totalorder %s35, %s36
      %p47 = scmp.eq.s32.totalorder %s27, 0
      %p48 = por %p46, %p47
      %p49 = scmp.ne.s32.totalorder %s35, %s36
      %p50 = scmp.eq.s32.totalorder %s28, 1
      %p51 = por %p49, %p50
      %p53 = scmp.ne.s32.totalorder %s36, %s52
      %p54 = scmp.eq.s32.totalorder %s28, 0
      %p55 = por %p53, %p54
      %s57 = sadd.s32 %s56, 1
      %p60 = scmp.eq.s32.totalorder %s22, 1
      %p61 = scmp.ne.s32.totalorder %s56, %s58
      %p62 = scmp.eq.s32.totalorder %s22, 0
      %p63 = por %p61, %p62
      %p64 = scmp.ne.s32.totalorder %s56, %s58
      %p65 = scmp.eq.s32.totalorder %s27, 1
      %p66 = por %p64, %p65
      %p67 = scmp.ne.s32.totalorder %s58, %s59
      %p68 = scmp.eq.s32.totalorder %s27, 0
      %p69 = por %p67, %p68
      %p70 = scmp.ne.s32.totalorder %s58, %s59
      %p71 = scmp.eq.s32.totalorder %s28, 1
      %p72 = por %p70, %p71
      %p74 = scmp.ne.s32.totalorder %s59, %s73
      %p75 = scmp.eq.s32.totalorder %s28, 0
      %p76 = por %p74, %p75
      %s78 = sadd.s32 %s77, 1
      %p81 = scmp.eq.s32.totalorder %s22, 1
      %p82 = scmp.ne.s32.totalorder %s77, %s79
      %p83 = scmp.eq.s32.totalorder %s22, 0
      %p84 = por %p82, %p83
      %p85 = scmp.ne.s32.totalorder %s77, %s79
      %p86 = scmp.eq.s32.totalorder %s27, 1
      %p87 = por %p85, %p86
      %p88 = scmp.ne.s32.totalorder %s79, %s80
      %p89 = scmp.eq.s32.totalorder %s27, 0
      %p90 = por %p88, %p89
      %p91 = scmp.ne.s32.totalorder %s79, %s80
      %p92 = scmp.eq.s32.totalorder %s28, 1
      %p93 = por %p91, %p92
      %p95 = scmp.ne.s32.totalorder %s80, %s94
      %p96 = scmp.eq.s32.totalorder %s28, 0
      %p97 = por %p95, %p96
      %s99 = sadd.s32 %s98, 1
      %p102 = scmp.eq.s32.totalorder %s22, 1
      %p103 = scmp.ne.s32.totalorder %s98, %s100
      %p104 = scmp.eq.s32.totalorder %s22, 0
      %p105 = por %p103, %p104
      %p106 = scmp.ne.s32.totalorder %s98, %s100
      %p107 = scmp.eq.s32.totalorder %s27, 1
      %p108 = por %p106, %p107
      %p109 = scmp.ne.s32.totalorder %s100, %s101
      %p110 = scmp.eq.s32.totalorder %s27, 0
      %p111 = por %p109, %p110
      %p112 = scmp.ne.s32.totalorder %s100, %s101
      %p113 = scmp.eq.s32.totalorder %s28, 1
      %p114 = por %p112, %p113
      %p116 = scmp.ne.s32.totalorder %s101, %s115
      %p117 = scmp.eq.s32.totalorder %s28, 0
      %p118 = por %p116, %p117
      %s120 = sadd.s32 %s119, 1
      %p123 = scmp.eq.s32.totalorder %s22, 1
      %p124 = scmp.ne.s32.totalorder %s119, %s121
      %p125 = scmp.eq.s32.totalorder %s22, 0
      %p126 = por %p124, %p125
      %p127 = scmp.ne.s32.totalorder %s119, %s121
      %p128 = scmp.eq.s32.totalorder %s27, 1
      %p129 = por %p127, %p128
      %p130 = scmp.ne.s32.totalorder %s121, %s122
      %p131 = scmp.eq.s32.totalorder %s27, 0
      %p132 = por %p130, %p131
      %p133 = scmp.ne.s32.totalorder %s121, %s122
      %p134 = scmp.eq.s32.totalorder %s28, 1
      %p135 = por %p133, %p134
      %p137 = scmp.ne.s32.totalorder %s122, %s136
      %p138 = scmp.eq.s32.totalorder %s28, 0
      %p139 = por %p137, %p138
      %s141 = sadd.s32 %s140, 1
      %p144 = scmp.eq.s32.totalorder %s22, 1
      %p145 = scmp.ne.s32.totalorder %s140, %s142
      %p146 = scmp.eq.s32.totalorder %s22, 0
      %p147 = por %p145, %p146
      %p148 = scmp.ne.s32.totalorder %s140, %s142
      %p149 = scmp.eq.s32.totalorder %s27, 1
      %p150 = por %p148, %p149
      %p151 = scmp.ne.s32.totalorder %s142, %s143
      %p152 = scmp.eq.s32.totalorder %s27, 0
      %p153 = por %p151, %p152
      %p154 = scmp.ne.s32.totalorder %s142, %s143
      %p155 = scmp.eq.s32.totalorder %s28, 1
      %p156 = por %p154, %p155
      %p158 = scmp.ne.s32.totalorder %s143, %s157
      %p159 = scmp.eq.s32.totalorder %s28, 0
      %p160 = por %p158, %p159
      %s162 = sadd.s32 %s161, 1
      %p165 = scmp.eq.s32.totalorder %s22, 1
      %p166 = scmp.ne.s32.totalorder %s161, %s163
      %p167 = scmp.eq.s32.totalorder %s22, 0
      %p168 = por %p166, %p167
      %p169 = scmp.ne.s32.totalorder %s161, %s163
      %p170 = scmp.eq.s32.totalorder %s27, 1
      %p171 = por %p169, %p170
      %p172 = scmp.ne.s32.totalorder %s163, %s164
      %p173 = scmp.eq.s32.totalorder %s27, 0
      %p174 = por %p172, %p173
      %p175 = scmp.ne.s32.totalorder %s163, %s164
      %p176 = scmp.eq.s32.totalorder %s28, 1
      %p177 = por %p175, %p176
      %p179 = scmp.ne.s32.totalorder %s164, %s178
      %p180 = scmp.eq.s32.totalorder %s28, 0
      %p181 = por %p179, %p180
      %s183 = sadd.s32 %s182, 1
      %p186 = scmp.eq.s32.totalorder %s22, 1
      %p187 = scmp.ne.s32.totalorder %s182, %s184
      %p188 = scmp.eq.s32.totalorder %s22, 0
      %p189 = por %p187, %p188
      %p190 = scmp.ne.s32.totalorder %s182, %s184
      %p191 = scmp.eq.s32.totalorder %s27, 1
      %p192 = por %p190, %p191
      %p193 = scmp.ne.s32.totalorder %s184, %s185
      %p194 = scmp.eq.s32.totalorder %s27, 0
      %p195 = por %p193, %p194
      %p196 = scmp.ne.s32.totalorder %s184, %s185
      %p197 = scmp.eq.s32.totalorder %s28, 1
      %p198 = por %p196, %p197
      %p200 = scmp.ne.s32.totalorder %s185, %s199
      %p201 = scmp.eq.s32.totalorder %s28, 0
      %p202 = por %p200, %p201
      %s204 = sadd.s32 %s203, 1
      %p207 = scmp.eq.s32.totalorder %s22, 1
      %p208 = scmp.ne.s32.totalorder %s203, %s205
      %p209 = scmp.eq.s32.totalorder %s22, 0
      %p210 = por %p208, %p209
      %p211 = scmp.ne.s32.totalorder %s203, %s205
      %p212 = scmp.eq.s32.totalorder %s27, 1
      %p213 = por %p211, %p212
      %p214 = scmp.ne.s32.totalorder %s205, %s206
      %p215 = scmp.eq.s32.totalorder %s27, 0
      %p216 = por %p214, %p215
      %p217 = scmp.ne.s32.totalorder %s205, %s206
      %p218 = scmp.eq.s32.totalorder %s28, 1
      %p219 = por %p217, %p218
      %p221 = scmp.ne.s32.totalorder %s206, %s220
      %p222 = scmp.eq.s32.totalorder %s28, 0
      %p223 = por %p221, %p222
      %s225 = sadd.s32 %s224, 1
      %p228 = scmp.eq.s32.totalorder %s22, 1
      %p229 = scmp.ne.s32.totalorder %s224, %s226
      %p230 = scmp.eq.s32.totalorder %s22, 0
      %p231 = por %p229, %p230
      %p232 = scmp.ne.s32.totalorder %s224, %s226
      %p233 = scmp.eq.s32.totalorder %s27, 1
      %p234 = por %p232, %p233
      %p235 = scmp.ne.s32.totalorder %s226, %s227
      %p236 = scmp.eq.s32.totalorder %s27, 0
      %p237 = por %p235, %p236
      %p238 = scmp.ne.s32.totalorder %s226, %s227
      %p239 = scmp.eq.s32.totalorder %s28, 1
      %p240 = por %p238, %p239
      %p242 = scmp.ne.s32.totalorder %s227, %s241
      %p243 = scmp.eq.s32.totalorder %s28, 0
      %p244 = por %p242, %p243
      %s246 = sadd.s32 %s245, 1
      %p249 = scmp.eq.s32.totalorder %s22, 1
      %p250 = scmp.ne.s32.totalorder %s245, %s247
      %p251 = scmp.eq.s32.totalorder %s22, 0
      %p252 = por %p250, %p251
      %p253 = scmp.ne.s32.totalorder %s245, %s247
      %p254 = scmp.eq.s32.totalorder %s27, 1
      %p255 = por %p253, %p254
      %p256 = scmp.ne.s32.totalorder %s247, %s248
      %p257 = scmp.eq.s32.totalorder %s27, 0
      %p258 = por %p256, %p257
      %p259 = scmp.ne.s32.totalorder %s247, %s248
      %p260 = scmp.eq.s32.totalorder %s28, 1
      %p261 = por %p259, %p260
      %p263 = scmp.ne.s32.totalorder %s248, %s262
      %p264 = scmp.eq.s32.totalorder %s28, 0
      %p265 = por %p263, %p264
      %s267 = sadd.s32 %s266, 1
      %p270 = scmp.eq.s32.totalorder %s22, 1
      %p271 = scmp.ne.s32.totalorder %s266, %s268
      %p272 = scmp.eq.s32.totalorder %s22, 0
      %p273 = por %p271, %p272
      %p274 = scmp.ne.s32.totalorder %s266, %s268
      %p275 = scmp.eq.s32.totalorder %s27, 1
      %p276 = por %p274, %p275
      %p277 = scmp.ne.s32.totalorder %s268, %s269
      %p278 = scmp.eq.s32.totalorder %s27, 0
      %p279 = por %p277, %p278
      %p280 = scmp.ne.s32.totalorder %s268, %s269
      %p281 = scmp.eq.s32.totalorder %s28, 1
      %p282 = por %p280, %p281
      %p284 = scmp.ne.s32.totalorder %s269, %s283
      %p285 = scmp.eq.s32.totalorder %s28, 0
      %p286 = por %p284, %p285
      %s288 = sadd.s32 %s287, 1
      %p291 = scmp.eq.s32.totalorder %s22, 1
      %p292 = scmp.ne.s32.totalorder %s287, %s289
      %p293 = scmp.eq.s32.totalorder %s22, 0
      %p294 = por %p292, %p293
      %p295 = scmp.ne.s32.totalorder %s287, %s289
      %p296 = scmp.eq.s32.totalorder %s27, 1
      %p297 = por %p295, %p296
      %p298 = scmp.ne.s32.totalorder %s289, %s290
      %p299 = scmp.eq.s32.totalorder %s27, 0
      %p300 = por %p298, %p299
      %p301 = scmp.ne.s32.totalorder %s289, %s290
      %p302 = scmp.eq.s32.totalorder %s28, 1
      %p303 = por %p301, %p302
      %p305 = scmp.ne.s32.totalorder %s290, %s304
      %p306 = scmp.eq.s32.totalorder %s28, 0
      %p307 = por %p305, %p306
      %s308 = ssub.s32 %s22, %s29
      %p309 = scmp.eq.s32.totalorder %s308, 0
      %s311 = sadd.s32 %s310, 1
      %s312 = scalar_select %p309, %s310, %s311
      %p315 = pneg %p309
      %p316 = scmp.eq.s32.totalorder %s22, 1
      %p317 = por %p315, %p316
      %p318 = scmp.ne.s32.totalorder %s310, %s313
      %p319 = scmp.eq.s32.totalorder %s22, 0
      %p320 = por %p318, %p319
      %p321 = scmp.ne.s32.totalorder %s310, %s313
      %p322 = scmp.eq.s32.totalorder %s27, 1
      %p323 = por %p321, %p322
      %p324 = scmp.ne.s32.totalorder %s313, %s314
      %p325 = scmp.eq.s32.totalorder %s27, 0
      %p326 = por %p324, %p325
      %p327 = scmp.ne.s32.totalorder %s313, %s314
      %p328 = scmp.eq.s32.totalorder %s28, 1
      %p329 = por %p327, %p328
      %p331 = scmp.ne.s32.totalorder %s314, %s330
      %p332 = scmp.eq.s32.totalorder %s28, 0
      %p333 = por %p331, %p332
      %p334 = scmp.le.s32.totalorder 1, %s22
      %p335 = scmp.lt.s32.totalorder %s22, 3
      %p336 = pnand %p334, %p335
      %p337 = pneg %p336
      // Predicated region
      $region9: #{tpu_custom_call.1} parent=5 // pred_check
        _
      $region10: #{tpu_custom_call.1} parent=5 // pred_check_branch
        %339 = sbr.rel (%p336) target = $region12
      $region11: #{tpu_custom_call.1} parent=5 // pred_region
        %s340 = ssub.s32 %s22, 1
        // Predicated region
        $region13: #{tpu_custom_call.1} parent=11 // pred_check
          %p341 = pneg %p69
        $region14: #{tpu_custom_call.1} parent=11 // pred_check_branch
          %343 = sbr.rel (%p341) target = $region16
        $region15: #{tpu_custom_call.1} parent=11 // pred_region
          _
        $region16: #{tpu_custom_call.1} parent=11 // pred_fallthru
          _
        // Predicated region
        $region17: #{tpu_custom_call.1} parent=11 // pred_check
          %p344 = pneg %p90
        $region18: #{tpu_custom_call.1} parent=11 // pred_check_branch
          %346 = sbr.rel (%p344) target = $region20
        $region19: #{tpu_custom_call.1} parent=11 // pred_region
          _
        $region20: #{tpu_custom_call.1} parent=11 // pred_fallthru
          _
        // Predicated region
        $region21: #{tpu_custom_call.1} parent=11 // pred_check
          %p347 = pneg %p111
        $region22: #{tpu_custom_call.1} parent=11 // pred_check_branch
          %349 = sbr.rel (%p347) target = $region24
        $region23: #{tpu_custom_call.1} parent=11 // pred_region
          _
        $region24: #{tpu_custom_call.1} parent=11 // pred_fallthru
          _
        // Predicated region
        $region25: #{tpu_custom_call.1} parent=11 // pred_check
          %p350 = pneg %p132
        $region26: #{tpu_custom_call.1} parent=11 // pred_check_branch
          %352 = sbr.rel (%p350) target = $region28
        $region27: #{tpu_custom_call.1} parent=11 // pred_region
          _
        $region28: #{tpu_custom_call.1} parent=11 // pred_fallthru
          _
        // Predicated region
        $region29: #{tpu_custom_call.1} parent=11 // pred_check
          %p353 = pneg %p153
        $region30: #{tpu_custom_call.1} parent=11 // pred_check_branch
          %355 = sbr.rel (%p353) target = $region32
        $region31: #{tpu_custom_call.1} parent=11 // pred_region
          _
        $region32: #{tpu_custom_call.1} parent=11 // pred_fallthru
          _
        // Predicated region
        $region33: #{tpu_custom_call.1} parent=11 // pred_check
          %p356 = pneg %p174
        $region34: #{tpu_custom_call.1} parent=11 // pred_check_branch
          %358 = sbr.rel (%p356) target = $region36
        $region35: #{tpu_custom_call.1} parent=11 // pred_region
          _
        $region36: #{tpu_custom_call.1} parent=11 // pred_fallthru
          _
        // Predicated region
        $region37: #{tpu_custom_call.1} parent=11 // pred_check
          %p359 = pneg %p195
        $region38: #{tpu_custom_call.1} parent=11 // pred_check_branch
          %361 = sbr.rel (%p359) target = $region40
        $region39: #{tpu_custom_call.1} parent=11 // pred_region
          _
        $region40: #{tpu_custom_call.1} parent=11 // pred_fallthru
          _
        // Predicated region
        $region41: #{tpu_custom_call.1} parent=11 // pred_check
          %p362 = pneg %p216
        $region42: #{tpu_custom_call.1} parent=11 // pred_check_branch
          %364 = sbr.rel (%p362) target = $region44
        $region43: #{tpu_custom_call.1} parent=11 // pred_region
          _
        $region44: #{tpu_custom_call.1} parent=11 // pred_fallthru
          _
        // Predicated region
        $region45: #{tpu_custom_call.1} parent=11 // pred_check
          %p365 = pneg %p237
        $region46: #{tpu_custom_call.1} parent=11 // pred_check_branch
          %367 = sbr.rel (%p365) target = $region48
        $region47: #{tpu_custom_call.1} parent=11 // pred_region
          _
        $region48: #{tpu_custom_call.1} parent=11 // pred_fallthru
          _
        // Predicated region
        $region49: #{tpu_custom_call.1} parent=11 // pred_check
          %p368 = pneg %p258
        $region50: #{tpu_custom_call.1} parent=11 // pred_check_branch
          %370 = sbr.rel (%p368) target = $region52
        $region51: #{tpu_custom_call.1} parent=11 // pred_region
          _
        $region52: #{tpu_custom_call.1} parent=11 // pred_fallthru
          _
        // Predicated region
        $region53: #{tpu_custom_call.1} parent=11 // pred_check
          %p371 = pneg %p279
        $region54: #{tpu_custom_call.1} parent=11 // pred_check_branch
          %373 = sbr.rel (%p371) target = $region56
        $region55: #{tpu_custom_call.1} parent=11 // pred_region
          _
        $region56: #{tpu_custom_call.1} parent=11 // pred_fallthru
          _
        // Predicated region
        $region57: #{tpu_custom_call.1} parent=11 // pred_check
          %p374 = pneg %p300
        $region58: #{tpu_custom_call.1} parent=11 // pred_check_branch
          %376 = sbr.rel (%p374) target = $region60
        $region59: #{tpu_custom_call.1} parent=11 // pred_region
          _
        $region60: #{tpu_custom_call.1} parent=11 // pred_fallthru
          _
      $region12: #{tpu_custom_call.1} parent=5 // pred_fallthru
        _
      %p377 = scmp.lt.s32.totalorder %s22, 2
      // Predicated region
      $region61: #{tpu_custom_call.1} parent=5 // pred_check
        %p378 = pneg %p377
      $region62: #{tpu_custom_call.1} parent=5 // pred_check_branch
        %380 = sbr.rel (%p378) target = $region64
      $region63: #{tpu_custom_call.1} parent=5 // pred_region
        // Predicated region
        $region65: #{tpu_custom_call.1} parent=63 // pred_check
          %p381 = pneg %p42
        $region66: #{tpu_custom_call.1} parent=63 // pred_check_branch
          %383 = sbr.rel (%p381) target = $region68
        $region67: #{tpu_custom_call.1} parent=63 // pred_region
          %p384 = scmp.lt.s32.totalorder %s22, 1
          %s385 = scalar_select %p384, %s22, 1
          %s386 = smul.addr %s385, 8
          %s387 = scalar_lea.vmem %s0, %s386
        $region68: #{tpu_custom_call.1} parent=63 // pred_fallthru
          _
      $region64: #{tpu_custom_call.1} parent=5 // pred_fallthru
        _
      %p388 = scmp.le.s32.totalorder 1, %s22
      %p389 = scmp.lt.s32.totalorder %s22, 3
      %p390 = pnand %p388, %p389
      %p391 = pneg %p390
      // Predicated region
      $region69: #{tpu_custom_call.1} parent=5 // pred_check
        _
      $region70: #{tpu_custom_call.1} parent=5 // pred_check_branch
        %393 = sbr.rel (%p390) target = $region72
      $region71: #{tpu_custom_call.1} parent=5 // pred_region
        %s394 = ssub.s32 %s22, 1
        %p395 = scmp.lt.s32.totalorder %s27, 1
        %s396 = scalar_select %p395, %s27, 1
        %s397 = smul.addr %s396, 8
        %s398 = scalar_lea.vmem %s0, %s397
        %p399 = pneg %p48
        %p400 = pneg %p45
        %p401 = pneg %p69
        %p402 = pneg %p66
        %p403 = pneg %p90
        %p404 = pneg %p87
        %p405 = pneg %p111
        %p406 = pneg %p108
        %p407 = pneg %p132
        %p408 = pneg %p129
        %p409 = pneg %p153
        %p410 = pneg %p150
        %p411 = pneg %p174
        %p412 = pneg %p171
        %p413 = pneg %p195
        %p414 = pneg %p192
        %p415 = pneg %p216
        %p416 = pneg %p213
        %p417 = pneg %p237
        %p418 = pneg %p234
        %p419 = pneg %p258
        %p420 = pneg %p255
        %p421 = pneg %p279
        %p422 = pneg %p276
        %p423 = pneg %p300
        %p424 = pneg %p297
        %p425 = pneg %p326
        %p426 = pneg %p323
        %s427 = sand.u32 %s313, 1
        %s428 = scalar_lea.sflag [#allocation3], %s427
        %s429 = sand.u32 %s313, 1
        %s430 = smul.addr %s429, 8
        %s431 = scalar_lea.vmem [#allocation2], %s430
        %p432 = scmp.lt.s32.totalorder %s27, 1
        %s433 = scalar_select %p432, %s27, 1
        %s434 = smul.addr %s433, 8
        %s435 = scalar_lea.vmem %s0, %s434
        %v436 = vld [vmem:[%s435] sm:$0xff]
        %v437 = vld [vmem:[%s1] sm:$0xff]
        %v438 = vld [vmem:[%s1 + $0x8] sm:$0xff]
        %v439 = vld [vmem:[%s1 + $0x10] sm:$0xff]
        %v440 = vld [vmem:[%s1 + $0x18] sm:$0xff]
        %v441 = vld [vmem:[%s2] sm:$0x1]
        %v443 = vperm.slane %v441, 0
        %vm445 = vcmask 261120
        %v447 = vsel %vm445, %v436, 0
        %449 = vmatpush.msra.mxu0 0.0
        %450 = vmatpush.msra.mxu0 0.0
        %451 = vmatpush.msra.mxu0 0.0
        %452 = vmatpush.msra.mxu0 0.0
        %453 = vmatpush.msra.mxu0 0.0
        %454 = vmatpush.msra.mxu0 0.0
        %455 = vmatpush.msra.mxu0 0.0
        %456 = vmatpush.msra.mxu0 0.0
        %457 = vmatpush.msra.mxu0 0.0
        %458 = vmatpush.msra.mxu0 0.0
        %459 = vmatpush.msra.mxu0 0.0
        %460 = vmatpush.msra.mxu0 0.0
        %461 = vmatpush.msra.mxu0 %v440
        %462 = vmatpush.msra.mxu0 %v439
        %463 = vmatpush.msra.mxu0 %v438
        %464 = vmatpush.msra.mxu0 %v437
        %465 = vmatmul.f32.gmra.mxu0 %v447
        %v466 = vpop.f32.mrf.mxu0
        %v467 = vadd.f32 %v443, %v466
        %468 = vdwg.mxu0
        %v469 = vmul.f32 %v467, 0.35355338
        %471 = vrot.lane.b32.xlu0 %v467, 96
        %v472 = vpop.permute.xlu0 %471
        %v474 = vsel %vm445, %v469, 0
        %v476 = vsel %vm445, %v472, 0
        %478 = vmatpush.xpose.msra.mxu0 0.0
        %479 = vmatpush.xpose.msra.mxu0 0.0
        %480 = vmatpush.xpose.msra.mxu0 0.0
        %481 = vmatpush.xpose.msra.mxu0 0.0
        %482 = vmatpush.xpose.msra.mxu0 0.0
        %483 = vmatpush.xpose.msra.mxu0 0.0
        %484 = vmatpush.xpose.msra.mxu0 0.0
        %485 = vmatpush.xpose.msra.mxu0 0.0
        %486 = vmatpush.xpose.msra.mxu0 0.0
        %487 = vmatpush.xpose.msra.mxu0 0.0
        %488 = vmatpush.xpose.msra.mxu0 0.0
        %489 = vmatpush.xpose.msra.mxu0 0.0
        %490 = vmatpush.xpose.msra.mxu0 0.0
        %491 = vmatpush.xpose.msra.mxu0 0.0
        %492 = vmatpush.xpose.msra.mxu0 0.0
        %493 = vmatpush.xpose.msra.mxu0 %v476
        %494 = vmatmul.f32.gmra.mxu0 %v474
        %v495 = vpop.f32.mrf.mxu0
        %v496 = vadd.f32 0.0, %v495
        %497 = vdwg.mxu0
        %vm498 = vcmask 64512
        %v499 = vsel %vm498, %v496, -inf
        %500 = vmax.xlane.f32.xlu0 %v499
        %v501 = vpop.xlane.xlu0 %500
        %v502 = vsub.f32 %v496, %v501
        %v503 = vmul.f32 %v502, 1.442695
        %v504 = vpow.pop %v503
        %v505 = vsel %vm498, %v504, 0.0
        %506 = vadd.xlane.f32.xlu0 %v505
        %v507 = vpop.xlane.xlu0 %506
        %v508 = vrcp.pop %v507
        %v509 = vmul.f32 %v507, %v508
        %v510 = vsub.f32 1.0, %v509
        %v511 = vmul.f32 %v508, %v510
        %v512 = vadd.f32 %v508, %v511
        %vm513 = vweird.f32 %v507
        %vm514 = vweird.f32 %v508
        %vm515 = vmor %vm513, %vm514
        %v516 = vsel %vm515, %v508, %v512
        %v517 = vand.u32 2147483647, %v507
        %vm518 = vcmp.eq.f32.partialorder %v517, 8.507059e+37
        %v519 = vand.u32 %v507, 2147483648
        %v520 = vor.u32 1.1754944e-38, %v519
        %v521 = vsel %vm518, %v520, %v516
        %v522 = vmul.f32 %v504, %v521
        %523 = vrot.lane.b32.xlu0 %v467, 64
        %v524 = vpop.permute.xlu0 %523
        %v527 = vsel %vm498, %v522, 0
        %529 = vmatpush.msra.mxu0 0.0
        %530 = vmatpush.msra.mxu0 0.0
        %531 = vmatpush.msra.mxu0 0.0
        %532 = vmatpush.msra.mxu0 0.0
        %533 = vmatpush.msra.mxu0 0.0
        %534 = vmatpush.msra.mxu0 0.0
        %535 = vmatpush.msra.mxu0 0.0
        %536 = vmatpush.msra.mxu0 0.0
        %537 = vmatpush.msra.mxu0 0.0
        %538 = vmatpush.msra.mxu0 0.0
        %539 = vmatpush.msra.mxu0 0.0
        %540 = vmatpush.msra.mxu0 0.0
        %541 = vmatpush.msra.mxu0 0.0
        %542 = vmatpush.msra.mxu0 0.0
        %543 = vmatpush.msra.mxu0 0.0
        %544 = vmatpush.msra.mxu0 %v524
        %545 = vmatmul.f32.gmra.mxu0 %v527
        %v546 = vpop.f32.mrf.mxu0
        %v547 = vadd.f32 0.0, %v546
        %548 = vdwg.mxu0
        %v549 = vld [vmem:[%s3] sm:$0xff]
        %v550 = vld [vmem:[%s3 + $0x8] sm:$0xff]
        %v551 = vld [vmem:[%s3 + $0x10] sm:$0xff]
        %v552 = vld [vmem:[%s3 + $0x18] sm:$0xff]
        %v553 = vld [vmem:[%s4] sm:$0x1]
        %v555 = vperm.slane %v553, 0
        %v558 = vsel %vm445, %v547, 0
        %560 = vmatpush.msra.mxu0 0.0
        %561 = vmatpush.msra.mxu0 0.0
        %562 = vmatpush.msra.mxu0 0.0
        %563 = vmatpush.msra.mxu0 0.0
        %564 = vmatpush.msra.mxu0 0.0
        %565 = vmatpush.msra.mxu0 0.0
        %566 = vmatpush.msra.mxu0 0.0
        %567 = vmatpush.msra.mxu0 0.0
        %568 = vmatpush.msra.mxu0 0.0
        %569 = vmatpush.msra.mxu0 0.0
        %570 = vmatpush.msra.mxu0 0.0
        %571 = vmatpush.msra.mxu0 0.0
        %572 = vmatpush.msra.mxu0 %v552
        %573 = vmatpush.msra.mxu0 %v551
        %574 = vmatpush.msra.mxu0 %v550
        %575 = vmatpush.msra.mxu0 %v549
        %576 = vmatmul.f32.gmra.mxu0 %v558
        %v577 = vpop.f32.mrf.mxu0
        %v578 = vadd.f32 %v555, %v577
        %579 = vdwg.mxu0
        %v580 = vadd.f32 %v578, %v436
        %v581 = vld [vmem:[%s5] sm:$0x1]
        %v582 = vld [vmem:[%s6] sm:$0x1]
        %v583 = vsel %vm445, %v580, 0.0
        %584 = vadd.xlane.f32.xlu0 %v583
        %v585 = vpop.xlane.xlu0 %584
        %v586 = vrcp.pop 32.0
        %v587 = vmul.f32 32.0, %v586
        %v588 = vsub.f32 1.0, %v587
        %v589 = vmul.f32 %v586, %v588
        %v590 = vadd.f32 %v586, %v589
        %vm591 = vweird.f32 %v586
        %v592 = vsel %vm591, %v586, %v590
        %v593 = vmul.f32 %v585, %v592
        %v594 = vsub.f32 %v580, %v593
        %v595 = vmul.f32 %v594, %v594
        %v596 = vsel %vm445, %v595, 0.0
        %597 = vadd.xlane.f32.xlu0 %v596
        %v598 = vpop.xlane.xlu0 %597
        %v599 = vmul.f32 %v598, %v592
        %v600 = vadd.f32 %v599, 1e-05
        %v601 = vrsqrt.pop %v600
        %v602 = vmul.f32 %v601, %v600
        %v603 = vmul.f32 %v602, %v601
        %v604 = vmul.f32 0.5, %v603
        %v605 = vsub.f32 1.5, %v604
        %v606 = vmul.f32 %v601, %v605
        %vm607 = vweird.f32 %v600
        %vm608 = vweird.f32 %v601
        %vm609 = vmor %vm607, %vm608
        %v610 = vsel %vm609, %v601, %v606
        %v611 = vmul.f32 %v594, %v610
        %v613 = vperm.slane %v581, 0
        %v615 = vmul.f32 %v611, %v613
        %v617 = vperm.slane %v582, 0
        %v619 = vadd.f32 %v615, %v617
        %v620 = vld [vmem:[%s7] sm:$0xff]
        %v621 = vld [vmem:[%s7 + $0x8] sm:$0xff]
        %v622 = vld [vmem:[%s7 + $0x10] sm:$0xff]
        %v623 = vld [vmem:[%s7 + $0x18] sm:$0xff]
        %v624 = vld [vmem:[%s8] sm:$0x1]
        %v626 = vperm.slane %v624, 0
        %v629 = vsel %vm445, %v619, 0
        %631 = vmatpush.msra.mxu0 0.0
        %632 = vmatpush.msra.mxu0 0.0
        %633 = vmatpush.msra.mxu0 0.0
        %634 = vmatpush.msra.mxu0 0.0
        %635 = vmatpush.msra.mxu0 0.0
        %636 = vmatpush.msra.mxu0 0.0
        %637 = vmatpush.msra.mxu0 0.0
        %638 = vmatpush.msra.mxu0 0.0
        %639 = vmatpush.msra.mxu0 0.0
        %640 = vmatpush.msra.mxu0 0.0
        %641 = vmatpush.msra.mxu0 0.0
        %642 = vmatpush.msra.mxu0 0.0
        %643 = vmatpush.msra.mxu0 %v623
        %644 = vmatpush.msra.mxu0 %v622
        %645 = vmatpush.msra.mxu0 %v621
        %646 = vmatpush.msra.mxu0 %v620
        %647 = vmatmul.f32.gmra.mxu0 %v629
        %v648 = vpop.f32.mrf.mxu0
        %v649 = vadd.f32 %v626, %v648
        %650 = vdwg.mxu0
        %v651 = vmax.f32 %v649, 0.0
        %v652 = vld [vmem:[%s9] sm:$0xff]
        %v653 = vld [vmem:[%s9 + $0x8] sm:$0xff]
        %v654 = vld [vmem:[%s9 + $0x10] sm:$0xff]
        %v655 = vld [vmem:[%s9 + $0x18] sm:$0xff]
        %v656 = vld [vmem:[%s9 + $0x20] sm:$0xff]
        %v657 = vld [vmem:[%s9 + $0x28] sm:$0xff]
        %v658 = vld [vmem:[%s9 + $0x30] sm:$0xff]
        %v659 = vld [vmem:[%s9 + $0x38] sm:$0xff]
        %v660 = vld [vmem:[%s9 + $0x40] sm:$0xff]
        %v661 = vld [vmem:[%s9 + $0x48] sm:$0xff]
        %v662 = vld [vmem:[%s9 + $0x50] sm:$0xff]
        %v663 = vld [vmem:[%s9 + $0x58] sm:$0xff]
        %v664 = vld [vmem:[%s9 + $0x60] sm:$0xff]
        %v665 = vld [vmem:[%s9 + $0x68] sm:$0xff]
        %v666 = vld [vmem:[%s9 + $0x70] sm:$0xff]
        %v667 = vld [vmem:[%s9 + $0x78] sm:$0xff]
        %v668 = vld [vmem:[%s10] sm:$0x1]
        %v670 = vperm.slane %v668, 0
        %672 = vmatpush.msra.mxu0 %v667
        %673 = vmatpush.msra.mxu0 %v666
        %674 = vmatpush.msra.mxu0 %v665
        %675 = vmatpush.msra.mxu0 %v664
        %676 = vmatpush.msra.mxu0 %v663
        %677 = vmatpush.msra.mxu0 %v662
        %678 = vmatpush.msra.mxu0 %v661
        %679 = vmatpush.msra.mxu0 %v660
        %680 = vmatpush.msra.mxu0 %v659
        %681 = vmatpush.msra.mxu0 %v658
        %682 = vmatpush.msra.mxu0 %v657
        %683 = vmatpush.msra.mxu0 %v656
        %684 = vmatpush.msra.mxu0 %v655
        %685 = vmatpush.msra.mxu0 %v654
        %686 = vmatpush.msra.mxu0 %v653
        %687 = vmatpush.msra.mxu0 %v652
        %688 = vmatmul.f32.gmra.mxu0 %v651
        %v689 = vpop.f32.mrf.mxu0
        %v690 = vadd.f32 %v670, %v689
        %691 = vdwg.mxu0
        %v692 = vadd.f32 %v690, %v619
        %v693 = vld [vmem:[%s11] sm:$0x1]
        %v694 = vld [vmem:[%s12] sm:$0x1]
        %v695 = vsel %vm445, %v692, 0.0
        %696 = vadd.xlane.f32.xlu0 %v695
        %v697 = vpop.xlane.xlu0 %696
        %v698 = vmul.f32 %v697, %v592
        %v699 = vsub.f32 %v692, %v698
        %v700 = vmul.f32 %v699, %v699
        %v701 = vsel %vm445, %v700, 0.0
        %702 = vadd.xlane.f32.xlu0 %v701
        %v703 = vpop.xlane.xlu0 %702
        %v704 = vmul.f32 %v703, %v592
        %v705 = vadd.f32 %v704, 1e-05
        %v706 = vrsqrt.pop %v705
        %v707 = vmul.f32 %v706, %v705
        %v708 = vmul.f32 %v707, %v706
        %v709 = vmul.f32 0.5, %v708
        %v710 = vsub.f32 1.5, %v709
        %v711 = vmul.f32 %v706, %v710
        %vm712 = vweird.f32 %v705
        %vm713 = vweird.f32 %v706
        %vm714 = vmor %vm712, %vm713
        %v715 = vsel %vm714, %v706, %v711
        %v716 = vmul.f32 %v699, %v715
        %v718 = vperm.slane %v693, 0
        %v720 = vmul.f32 %v716, %v718
        %v722 = vperm.slane %v694, 0
        %v724 = vadd.f32 %v720, %v722
        %725 = vst.msk [vmem:[%s431] sm:$0xff] %vm445, %v724
        %s726 = sand.u32 %s313, 1
        %s727 = scalar_lea.sflag [#allocation3], %s726
        %s728 = sand.u32 %s313, 1
        %s729 = smul.addr %s728, 8
        %s730 = scalar_lea.vmem [#allocation2], %s729
        // Predicated region
        $region73: #{tpu_custom_call.1} parent=71 // pred_check
          %p731 = pneg %p323
        $region74: #{tpu_custom_call.1} parent=71 // pred_check_branch
          %733 = sbr.rel (%p731) target = $region76
        $region75: #{tpu_custom_call.1} parent=71 // pred_region
          %735 = vsyncadd %s727, 0
          %s736 = smul.addr %s27, 8
          %s737 = scalar_lea.hbm %s13, %s736
          %s739 = sshll.u32 %s730, 4
          %s740 = int_to_ptr.vmem [resolvable:$true] %s739
          %s741 = sshll.u32 %s737, 4
          %s742 = int_to_ptr.hbm [resolvable:$true] %s741
          %744 = dma.vmem_to_hbm [thread:$0]  %s740, 128, %s742, %s727
        $region76: #{tpu_custom_call.1} parent=71 // pred_fallthru
          _
      $region72: #{tpu_custom_call.1} parent=5 // pred_fallthru
        _
      %p745 = scmp.le.s32.totalorder 2, %s22
      // Predicated region
      $region77: #{tpu_custom_call.1} parent=5 // pred_check
        %p746 = pneg %p745
      $region78: #{tpu_custom_call.1} parent=5 // pred_check_branch
        %748 = sbr.rel (%p746) target = $region80
      $region79: #{tpu_custom_call.1} parent=5 // pred_region
        %s749 = ssub.s32 %s22, 2
        // Predicated region
        $region81: #{tpu_custom_call.1} parent=79 // pred_check
          %p750 = pneg %p329
        $region82: #{tpu_custom_call.1} parent=79 // pred_check_branch
          %752 = sbr.rel (%p750) target = $region84
        $region83: #{tpu_custom_call.1} parent=79 // pred_region
          %s753 = sand.u32 %s314, 1
          %s754 = scalar_lea.sflag [#allocation3], %s753
          %s755 = sand.u32 %s314, 1
          %s756 = smul.addr %s755, 8
          %s757 = scalar_lea.vmem [#allocation2], %s756
          %759 = dma.done %s754, 128
        $region84: #{tpu_custom_call.1} parent=79 // pred_fallthru
          _
      $region80: #{tpu_custom_call.1} parent=5 // pred_fallthru
        _
    $region6: #{tpu_custom_call.1} parent=1 // loop_footer
      %s26 = sadd.s32 1, %s22
    $region7: #{tpu_custom_call.1} parent=1 // loop_footer_branch
      %21 = sbr.rel target = $region3
    $region8: #{tpu_custom_call.1} parent=1 // loop_exit
      _
    %760 = vsyncpa [#allocation3], 1
    %s761 = scalar_lea.sflag [#allocation3], 1
    %762 = vsyncpa %s761, 1

// kernel: tpu_custom_call.1
$region0: #{tpu_custom_call.1}
  #allocation0 [shape = 'u32[]', space=smem, size = 0x4, offset = 0x4, fixed_abs, tag = 'smem constant byte address 0x4 - core index']
  #allocation1 [shape = 'u32[72,128]{1,0:T(1,128)}', space=vmem, size = 0x9000, scoped, tag = 'internal scratch']
  %s0 = inlined_call_operand.vmem [shape: f32[2,8,32], index: 0, kind: input, shape index: {}]
  %s1 = inlined_call_operand.vmem [shape: f32[32,96], index: 1, kind: input, shape index: {}]
  %s2 = inlined_call_operand.vmem [shape: f32[1,96], index: 2, kind: input, shape index: {}]
  %s3 = inlined_call_operand.vmem [shape: f32[32,32], index: 3, kind: input, shape index: {}]
  %s4 = inlined_call_operand.vmem [shape: f32[1,32], index: 4, kind: input, shape index: {}]
  %s5 = inlined_call_operand.vmem [shape: f32[1,32], index: 5, kind: input, shape index: {}]
  %s6 = inlined_call_operand.vmem [shape: f32[1,32], index: 6, kind: input, shape index: {}]
  %s7 = inlined_call_operand.vmem [shape: f32[32,128], index: 7, kind: input, shape index: {}]
  %s8 = inlined_call_operand.vmem [shape: f32[1,128], index: 8, kind: input, shape index: {}]
  %s9 = inlined_call_operand.vmem [shape: f32[128,32], index: 9, kind: input, shape index: {}]
  %s10 = inlined_call_operand.vmem [shape: f32[1,32], index: 10, kind: input, shape index: {}]
  %s11 = inlined_call_operand.vmem [shape: f32[1,32], index: 11, kind: input, shape index: {}]
  %s12 = inlined_call_operand.vmem [shape: f32[1,32], index: 12, kind: input, shape index: {}]
  %s13 = inlined_call_operand.hbm [shape: f32[2,8,32], index: 13, kind: output, shape index: {}]
  %s14 = sld [smem:[#allocation0]]
  $region85: #{tpu_custom_call.1} parent=0
    _
  %s16 = ssub.s32 1, %s14
  %s17 = scalar_select 0, %s16, %s14
  $region1: #{tpu_custom_call.1} parent=0
    #allocation2 [shape = 'u8[8192]{0}', space=vmem, size = 0x2000, scoped, tag = 'output window, operand 0']
    #allocation3 [shape = 's32[2]{0}', space=sflag, size = 0x8, scoped, tag = 'scoped memory for tpu_custom_call.1']
    %18 = vsyncpa [#allocation3], 0
    %s19 = scalar_lea.sflag [#allocation3], 1
    %20 = vsyncpa %s19, 0
    loop: start=0, step=1, limit=4
    $region2: #{tpu_custom_call.1} parent=1 // loop_pre_header
      _
    $region3: #{tpu_custom_call.1} parent=1 // loop_header
      %s22 = sphi 0, %s26
      %p23 = scmp.ge.s32.totalorder %s22, 4
      %s32 = sphi 0, %s34
      %s35 = sphi 0, %s32
      %s36 = sphi 0, %s35
      %s52 = sphi 0, %s36
      %s56 = sphi 0, %s56
      %s58 = sphi 0, %s56
      %s59 = sphi 0, %s58
      %s73 = sphi 0, %s59
      %s77 = sphi 0, %s77
      %s79 = sphi 0, %s77
      %s80 = sphi 0, %s79
      %s94 = sphi 0, %s80
      %s98 = sphi 0, %s98
      %s100 = sphi 0, %s98
      %s101 = sphi 0, %s100
      %s115 = sphi 0, %s101
      %s119 = sphi 0, %s119
      %s121 = sphi 0, %s119
      %s122 = sphi 0, %s121
      %s136 = sphi 0, %s122
      %s140 = sphi 0, %s140
      %s142 = sphi 0, %s140
      %s143 = sphi 0, %s142
      %s157 = sphi 0, %s143
      %s161 = sphi 0, %s161
      %s163 = sphi 0, %s161
      %s164 = sphi 0, %s163
      %s178 = sphi 0, %s164
      %s182 = sphi 0, %s182
      %s184 = sphi 0, %s182
      %s185 = sphi 0, %s184
      %s199 = sphi 0, %s185
      %s203 = sphi 0, %s203
      %s205 = sphi 0, %s203
      %s206 = sphi 0, %s205
      %s220 = sphi 0, %s206
      %s224 = sphi 0, %s224
      %s226 = sphi 0, %s224
      %s227 = sphi 0, %s226
      %s241 = sphi 0, %s227
      %s245 = sphi 0, %s245
      %s247 = sphi 0, %s245
      %s248 = sphi 0, %s247
      %s262 = sphi 0, %s248
      %s266 = sphi 0, %s266
      %s268 = sphi 0, %s266
      %s269 = sphi 0, %s268
      %s283 = sphi 0, %s269
      %s287 = sphi 0, %s287
      %s289 = sphi 0, %s287
      %s290 = sphi 0, %s289
      %s304 = sphi 0, %s290
      %s310 = sphi 0, %s312
      %s313 = sphi 0, %s310
      %s314 = sphi 0, %s313
      %s330 = sphi 0, %s314
    $region4: #{tpu_custom_call.1} parent=1 // loop_header_branch
      %25 = sbr.rel (%p23) target = $region8
    $region5: #{tpu_custom_call.1} parent=1 // loop_body
      %s27 = ssub.s32 %s22, 1
      %s28 = ssub.s32 %s22, 2
      %s29 = sadd.s32 %s22, 1
      %s30 = ssub.s32 %s22, %s29
      %p31 = scmp.eq.s32.totalorder %s30, 0
      %s33 = sadd.s32 %s32, 1
      %s34 = scalar_select %p31, %s32, %s33
      %p37 = pneg %p31
      %p38 = scmp.eq.s32.totalorder %s22, 1
      %p39 = por %p37, %p38
      %p40 = scmp.ne.s32.totalorder %s32, %s35
      %p41 = scmp.eq.s32.totalorder %s22, 0
      %p42 = por %p40, %p41
      %p43 = scmp.ne.s32.totalorder %s32, %s35
      %p44 = scmp.eq.s32.totalorder %s27, 1
      %p45 = por %p43, %p44
      %p46 = scmp.ne.s32.totalorder %s35, %s36
      %p47 = scmp.eq.s32.totalorder %s27, 0
      %p48 = por %p46, %p47
      %p49 = scmp.ne.s32.totalorder %s35, %s36
      %p50 = scmp.eq.s32.totalorder %s28, 1
      %p51 = por %p49, %p50
      %p53 = scmp.ne.s32.totalorder %s36, %s52
      %p54 = scmp.eq.s32.totalorder %s28, 0
      %p55 = por %p53, %p54
      %s57 = sadd.s32 %s56, 1
      %p60 = scmp.eq.s32.totalorder %s22, 1
      %p61 = scmp.ne.s32.totalorder %s56, %s58
      %p62 = scmp.eq.s32.totalorder %s22, 0
      %p63 = por %p61, %p62
      %p64 = scmp.ne.s32.totalorder %s56, %s58
      %p65 = scmp.eq.s32.totalorder %s27, 1
      %p66 = por %p64, %p65
      %p67 = scmp.ne.s32.totalorder %s58, %s59
      %p68 = scmp.eq.s32.totalorder %s27, 0
      %p69 = por %p67, %p68
      %p70 = scmp.ne.s32.totalorder %s58, %s59
      %p71 = scmp.eq.s32.totalorder %s28, 1
      %p72 = por %p70, %p71
      %p74 = scmp.ne.s32.totalorder %s59, %s73
      %p75 = scmp.eq.s32.totalorder %s28, 0
      %p76 = por %p74, %p75
      %s78 = sadd.s32 %s77, 1
      %p81 = scmp.eq.s32.totalorder %s22, 1
      %p82 = scmp.ne.s32.totalorder %s77, %s79
      %p83 = scmp.eq.s32.totalorder %s22, 0
      %p84 = por %p82, %p83
      %p85 = scmp.ne.s32.totalorder %s77, %s79
      %p86 = scmp.eq.s32.totalorder %s27, 1
      %p87 = por %p85, %p86
      %p88 = scmp.ne.s32.totalorder %s79, %s80
      %p89 = scmp.eq.s32.totalorder %s27, 0
      %p90 = por %p88, %p89
      %p91 = scmp.ne.s32.totalorder %s79, %s80
      %p92 = scmp.eq.s32.totalorder %s28, 1
      %p93 = por %p91, %p92
      %p95 = scmp.ne.s32.totalorder %s80, %s94
      %p96 = scmp.eq.s32.totalorder %s28, 0
      %p97 = por %p95, %p96
      %s99 = sadd.s32 %s98, 1
      %p102 = scmp.eq.s32.totalorder %s22, 1
      %p103 = scmp.ne.s32.totalorder %s98, %s100
      %p104 = scmp.eq.s32.totalorder %s22, 0
      %p105 = por %p103, %p104
      %p106 = scmp.ne.s32.totalorder %s98, %s100
      %p107 = scmp.eq.s32.totalorder %s27, 1
      %p108 = por %p106, %p107
      %p109 = scmp.ne.s32.totalorder %s100, %s101
      %p110 = scmp.eq.s32.totalorder %s27, 0
      %p111 = por %p109, %p110
      %p112 = scmp.ne.s32.totalorder %s100, %s101
      %p113 = scmp.eq.s32.totalorder %s28, 1
      %p114 = por %p112, %p113
      %p116 = scmp.ne.s32.totalorder %s101, %s115
      %p117 = scmp.eq.s32.totalorder %s28, 0
      %p118 = por %p116, %p117
      %s120 = sadd.s32 %s119, 1
      %p123 = scmp.eq.s32.totalorder %s22, 1
      %p124 = scmp.ne.s32.totalorder %s119, %s121
      %p125 = scmp.eq.s32.totalorder %s22, 0
      %p126 = por %p124, %p125
      %p127 = scmp.ne.s32.totalorder %s119, %s121
      %p128 = scmp.eq.s32.totalorder %s27, 1
      %p129 = por %p127, %p128
      %p130 = scmp.ne.s32.totalorder %s121, %s122
      %p131 = scmp.eq.s32.totalorder %s27, 0
      %p132 = por %p130, %p131
      %p133 = scmp.ne.s32.totalorder %s121, %s122
      %p134 = scmp.eq.s32.totalorder %s28, 1
      %p135 = por %p133, %p134
      %p137 = scmp.ne.s32.totalorder %s122, %s136
      %p138 = scmp.eq.s32.totalorder %s28, 0
      %p139 = por %p137, %p138
      %s141 = sadd.s32 %s140, 1
      %p144 = scmp.eq.s32.totalorder %s22, 1
      %p145 = scmp.ne.s32.totalorder %s140, %s142
      %p146 = scmp.eq.s32.totalorder %s22, 0
      %p147 = por %p145, %p146
      %p148 = scmp.ne.s32.totalorder %s140, %s142
      %p149 = scmp.eq.s32.totalorder %s27, 1
      %p150 = por %p148, %p149
      %p151 = scmp.ne.s32.totalorder %s142, %s143
      %p152 = scmp.eq.s32.totalorder %s27, 0
      %p153 = por %p151, %p152
      %p154 = scmp.ne.s32.totalorder %s142, %s143
      %p155 = scmp.eq.s32.totalorder %s28, 1
      %p156 = por %p154, %p155
      %p158 = scmp.ne.s32.totalorder %s143, %s157
      %p159 = scmp.eq.s32.totalorder %s28, 0
      %p160 = por %p158, %p159
      %s162 = sadd.s32 %s161, 1
      %p165 = scmp.eq.s32.totalorder %s22, 1
      %p166 = scmp.ne.s32.totalorder %s161, %s163
      %p167 = scmp.eq.s32.totalorder %s22, 0
      %p168 = por %p166, %p167
      %p169 = scmp.ne.s32.totalorder %s161, %s163
      %p170 = scmp.eq.s32.totalorder %s27, 1
      %p171 = por %p169, %p170
      %p172 = scmp.ne.s32.totalorder %s163, %s164
      %p173 = scmp.eq.s32.totalorder %s27, 0
      %p174 = por %p172, %p173
      %p175 = scmp.ne.s32.totalorder %s163, %s164
      %p176 = scmp.eq.s32.totalorder %s28, 1
      %p177 = por %p175, %p176
      %p179 = scmp.ne.s32.totalorder %s164, %s178
      %p180 = scmp.eq.s32.totalorder %s28, 0
      %p181 = por %p179, %p180
      %s183 = sadd.s32 %s182, 1
      %p186 = scmp.eq.s32.totalorder %s22, 1
      %p187 = scmp.ne.s32.totalorder %s182, %s184
      %p188 = scmp.eq.s32.totalorder %s22, 0
      %p189 = por %p187, %p188
      %p190 = scmp.ne.s32.totalorder %s182, %s184
      %p191 = scmp.eq.s32.totalorder %s27, 1
      %p192 = por %p190, %p191
      %p193 = scmp.ne.s32.totalorder %s184, %s185
      %p194 = scmp.eq.s32.totalorder %s27, 0
      %p195 = por %p193, %p194
      %p196 = scmp.ne.s32.totalorder %s184, %s185
      %p197 = scmp.eq.s32.totalorder %s28, 1
      %p198 = por %p196, %p197
      %p200 = scmp.ne.s32.totalorder %s185, %s199
      %p201 = scmp.eq.s32.totalorder %s28, 0
      %p202 = por %p200, %p201
      %s204 = sadd.s32 %s203, 1
      %p207 = scmp.eq.s32.totalorder %s22, 1
      %p208 = scmp.ne.s32.totalorder %s203, %s205
      %p209 = scmp.eq.s32.totalorder %s22, 0
      %p210 = por %p208, %p209
      %p211 = scmp.ne.s32.totalorder %s203, %s205
      %p212 = scmp.eq.s32.totalorder %s27, 1
      %p213 = por %p211, %p212
      %p214 = scmp.ne.s32.totalorder %s205, %s206
      %p215 = scmp.eq.s32.totalorder %s27, 0
      %p216 = por %p214, %p215
      %p217 = scmp.ne.s32.totalorder %s205, %s206
      %p218 = scmp.eq.s32.totalorder %s28, 1
      %p219 = por %p217, %p218
      %p221 = scmp.ne.s32.totalorder %s206, %s220
      %p222 = scmp.eq.s32.totalorder %s28, 0
      %p223 = por %p221, %p222
      %s225 = sadd.s32 %s224, 1
      %p228 = scmp.eq.s32.totalorder %s22, 1
      %p229 = scmp.ne.s32.totalorder %s224, %s226
      %p230 = scmp.eq.s32.totalorder %s22, 0
      %p231 = por %p229, %p230
      %p232 = scmp.ne.s32.totalorder %s224, %s226
      %p233 = scmp.eq.s32.totalorder %s27, 1
      %p234 = por %p232, %p233
      %p235 = scmp.ne.s32.totalorder %s226, %s227
      %p236 = scmp.eq.s32.totalorder %s27, 0
      %p237 = por %p235, %p236
      %p238 = scmp.ne.s32.totalorder %s226, %s227
      %p239 = scmp.eq.s32.totalorder %s28, 1
      %p240 = por %p238, %p239
      %p242 = scmp.ne.s32.totalorder %s227, %s241
      %p243 = scmp.eq.s32.totalorder %s28, 0
      %p244 = por %p242, %p243
      %s246 = sadd.s32 %s245, 1
      %p249 = scmp.eq.s32.totalorder %s22, 1
      %p250 = scmp.ne.s32.totalorder %s245, %s247
      %p251 = scmp.eq.s32.totalorder %s22, 0
      %p252 = por %p250, %p251
      %p253 = scmp.ne.s32.totalorder %s245, %s247
      %p254 = scmp.eq.s32.totalorder %s27, 1
      %p255 = por %p253, %p254
      %p256 = scmp.ne.s32.totalorder %s247, %s248
      %p257 = scmp.eq.s32.totalorder %s27, 0
      %p258 = por %p256, %p257
      %p259 = scmp.ne.s32.totalorder %s247, %s248
      %p260 = scmp.eq.s32.totalorder %s28, 1
      %p261 = por %p259, %p260
      %p263 = scmp.ne.s32.totalorder %s248, %s262
      %p264 = scmp.eq.s32.totalorder %s28, 0
      %p265 = por %p263, %p264
      %s267 = sadd.s32 %s266, 1
      %p270 = scmp.eq.s32.totalorder %s22, 1
      %p271 = scmp.ne.s32.totalorder %s266, %s268
      %p272 = scmp.eq.s32.totalorder %s22, 0
      %p273 = por %p271, %p272
      %p274 = scmp.ne.s32.totalorder %s266, %s268
      %p275 = scmp.eq.s32.totalorder %s27, 1
      %p276 = por %p274, %p275
      %p277 = scmp.ne.s32.totalorder %s268, %s269
      %p278 = scmp.eq.s32.totalorder %s27, 0
      %p279 = por %p277, %p278
      %p280 = scmp.ne.s32.totalorder %s268, %s269
      %p281 = scmp.eq.s32.totalorder %s28, 1
      %p282 = por %p280, %p281
      %p284 = scmp.ne.s32.totalorder %s269, %s283
      %p285 = scmp.eq.s32.totalorder %s28, 0
      %p286 = por %p284, %p285
      %s288 = sadd.s32 %s287, 1
      %p291 = scmp.eq.s32.totalorder %s22, 1
      %p292 = scmp.ne.s32.totalorder %s287, %s289
      %p293 = scmp.eq.s32.totalorder %s22, 0
      %p294 = por %p292, %p293
      %p295 = scmp.ne.s32.totalorder %s287, %s289
      %p296 = scmp.eq.s32.totalorder %s27, 1
      %p297 = por %p295, %p296
      %p298 = scmp.ne.s32.totalorder %s289, %s290
      %p299 = scmp.eq.s32.totalorder %s27, 0
      %p300 = por %p298, %p299
      %p301 = scmp.ne.s32.totalorder %s289, %s290
      %p302 = scmp.eq.s32.totalorder %s28, 1
      %p303 = por %p301, %p302
      %p305 = scmp.ne.s32.totalorder %s290, %s304
      %p306 = scmp.eq.s32.totalorder %s28, 0
      %p307 = por %p305, %p306
      %s308 = ssub.s32 %s22, %s29
      %p309 = scmp.eq.s32.totalorder %s308, 0
      %s311 = sadd.s32 %s310, 1
      %s312 = scalar_select %p309, %s310, %s311
      %p315 = pneg %p309
      %p316 = scmp.eq.s32.totalorder %s22, 1
      %p317 = por %p315, %p316
      %p318 = scmp.ne.s32.totalorder %s310, %s313
      %p319 = scmp.eq.s32.totalorder %s22, 0
      %p320 = por %p318, %p319
      %p321 = scmp.ne.s32.totalorder %s310, %s313
      %p322 = scmp.eq.s32.totalorder %s27, 1
      %p323 = por %p321, %p322
      %p324 = scmp.ne.s32.totalorder %s313, %s314
      %p325 = scmp.eq.s32.totalorder %s27, 0
      %p326 = por %p324, %p325
      %p327 = scmp.ne.s32.totalorder %s313, %s314
      %p328 = scmp.eq.s32.totalorder %s28, 1
      %p329 = por %p327, %p328
      %p331 = scmp.ne.s32.totalorder %s314, %s330
      %p332 = scmp.eq.s32.totalorder %s28, 0
      %p333 = por %p331, %p332
      %p334 = scmp.le.s32.totalorder 1, %s22
      %p335 = scmp.lt.s32.totalorder %s22, 3
      %p336 = pnand %p334, %p335
      %p337 = pneg %p336
      // Predicated region
      $region9: #{tpu_custom_call.1} parent=5 // pred_check
        _
      $region10: #{tpu_custom_call.1} parent=5 // pred_check_branch
        %339 = sbr.rel (%p336) target = $region12
      $region11: #{tpu_custom_call.1} parent=5 // pred_region
        %s340 = ssub.s32 %s22, 1
        // Predicated region
        $region13: #{tpu_custom_call.1} parent=11 // pred_check
          %p341 = pneg %p69
        $region14: #{tpu_custom_call.1} parent=11 // pred_check_branch
          %343 = sbr.rel (%p341) target = $region16
        $region15: #{tpu_custom_call.1} parent=11 // pred_region
          _
        $region16: #{tpu_custom_call.1} parent=11 // pred_fallthru
          _
        // Predicated region
        $region17: #{tpu_custom_call.1} parent=11 // pred_check
          %p344 = pneg %p90
        $region18: #{tpu_custom_call.1} parent=11 // pred_check_branch
          %346 = sbr.rel (%p344) target = $region20
        $region19: #{tpu_custom_call.1} parent=11 // pred_region
          _
        $region20: #{tpu_custom_call.1} parent=11 // pred_fallthru
          _
        // Predicated region
        $region21: #{tpu_custom_call.1} parent=11 // pred_check
          %p347 = pneg %p111
        $region22: #{tpu_custom_call.1} parent=11 // pred_check_branch
          %349 = sbr.rel (%p347) target = $region24
        $region23: #{tpu_custom_call.1} parent=11 // pred_region
          _
        $region24: #{tpu_custom_call.1} parent=11 // pred_fallthru
          _
        // Predicated region
        $region25: #{tpu_custom_call.1} parent=11 // pred_check
          %p350 = pneg %p132
        $region26: #{tpu_custom_call.1} parent=11 // pred_check_branch
          %352 = sbr.rel (%p350) target = $region28
        $region27: #{tpu_custom_call.1} parent=11 // pred_region
          _
        $region28: #{tpu_custom_call.1} parent=11 // pred_fallthru
          _
        // Predicated region
        $region29: #{tpu_custom_call.1} parent=11 // pred_check
          %p353 = pneg %p153
        $region30: #{tpu_custom_call.1} parent=11 // pred_check_branch
          %355 = sbr.rel (%p353) target = $region32
        $region31: #{tpu_custom_call.1} parent=11 // pred_region
          _
        $region32: #{tpu_custom_call.1} parent=11 // pred_fallthru
          _
        // Predicated region
        $region33: #{tpu_custom_call.1} parent=11 // pred_check
          %p356 = pneg %p174
        $region34: #{tpu_custom_call.1} parent=11 // pred_check_branch
          %358 = sbr.rel (%p356) target = $region36
        $region35: #{tpu_custom_call.1} parent=11 // pred_region
          _
        $region36: #{tpu_custom_call.1} parent=11 // pred_fallthru
          _
        // Predicated region
        $region37: #{tpu_custom_call.1} parent=11 // pred_check
          %p359 = pneg %p195
        $region38: #{tpu_custom_call.1} parent=11 // pred_check_branch
          %361 = sbr.rel (%p359) target = $region40
        $region39: #{tpu_custom_call.1} parent=11 // pred_region
          _
        $region40: #{tpu_custom_call.1} parent=11 // pred_fallthru
          _
        // Predicated region
        $region41: #{tpu_custom_call.1} parent=11 // pred_check
          %p362 = pneg %p216
        $region42: #{tpu_custom_call.1} parent=11 // pred_check_branch
          %364 = sbr.rel (%p362) target = $region44
        $region43: #{tpu_custom_call.1} parent=11 // pred_region
          _
        $region44: #{tpu_custom_call.1} parent=11 // pred_fallthru
          _
        // Predicated region
        $region45: #{tpu_custom_call.1} parent=11 // pred_check
          %p365 = pneg %p237
        $region46: #{tpu_custom_call.1} parent=11 // pred_check_branch
          %367 = sbr.rel (%p365) target = $region48
        $region47: #{tpu_custom_call.1} parent=11 // pred_region
          _
        $region48: #{tpu_custom_call.1} parent=11 // pred_fallthru
          _
        // Predicated region
        $region49: #{tpu_custom_call.1} parent=11 // pred_check
          %p368 = pneg %p258
        $region50: #{tpu_custom_call.1} parent=11 // pred_check_branch
          %370 = sbr.rel (%p368) target = $region52
        $region51: #{tpu_custom_call.1} parent=11 // pred_region
          _
        $region52: #{tpu_custom_call.1} parent=11 // pred_fallthru
          _
        // Predicated region
        $region53: #{tpu_custom_call.1} parent=11 // pred_check
          %p371 = pneg %p279
        $region54: #{tpu_custom_call.1} parent=11 // pred_check_branch
          %373 = sbr.rel (%p371) target = $region56
        $region55: #{tpu_custom_call.1} parent=11 // pred_region
          _
        $region56: #{tpu_custom_call.1} parent=11 // pred_fallthru
          _
        // Predicated region
        $region57: #{tpu_custom_call.1} parent=11 // pred_check
          %p374 = pneg %p300
        $region58: #{tpu_custom_call.1} parent=11 // pred_check_branch
          %376 = sbr.rel (%p374) target = $region60
        $region59: #{tpu_custom_call.1} parent=11 // pred_region
          _
        $region60: #{tpu_custom_call.1} parent=11 // pred_fallthru
          _
      $region12: #{tpu_custom_call.1} parent=5 // pred_fallthru
        _
      %p377 = scmp.lt.s32.totalorder %s22, 2
      // Predicated region
      $region61: #{tpu_custom_call.1} parent=5 // pred_check
        %p378 = pneg %p377
      $region62: #{tpu_custom_call.1} parent=5 // pred_check_branch
        %380 = sbr.rel (%p378) target = $region64
      $region63: #{tpu_custom_call.1} parent=5 // pred_region
        // Predicated region
        $region65: #{tpu_custom_call.1} parent=63 // pred_check
          %p381 = pneg %p42
        $region66: #{tpu_custom_call.1} parent=63 // pred_check_branch
          %383 = sbr.rel (%p381) target = $region68
        $region67: #{tpu_custom_call.1} parent=63 // pred_region
          %p384 = scmp.lt.s32.totalorder %s22, 1
          %s385 = scalar_select %p384, %s22, 1
          %s386 = smul.addr %s385, 8
          %s387 = scalar_lea.vmem %s0, %s386
        $region68: #{tpu_custom_call.1} parent=63 // pred_fallthru
          _
      $region64: #{tpu_custom_call.1} parent=5 // pred_fallthru
        _
      %p388 = scmp.le.s32.totalorder 1, %s22
      %p389 = scmp.lt.s32.totalorder %s22, 3
      %p390 = pnand %p388, %p389
      %p391 = pneg %p390
      // Predicated region
      $region69: #{tpu_custom_call.1} parent=5 // pred_check
        _
      $region70: #{tpu_custom_call.1} parent=5 // pred_check_branch
        %393 = sbr.rel (%p390) target = $region72
      $region71: #{tpu_custom_call.1} parent=5 // pred_region
        %s394 = ssub.s32 %s22, 1
        %p395 = scmp.lt.s32.totalorder %s27, 1
        %s396 = scalar_select %p395, %s27, 1
        %s397 = smul.addr %s396, 8
        %s398 = scalar_lea.vmem %s0, %s397
        %p399 = pneg %p48
        %p400 = pneg %p45
        %p401 = pneg %p69
        %p402 = pneg %p66
        %p403 = pneg %p90
        %p404 = pneg %p87
        %p405 = pneg %p111
        %p406 = pneg %p108
        %p407 = pneg %p132
        %p408 = pneg %p129
        %p409 = pneg %p153
        %p410 = pneg %p150
        %p411 = pneg %p174
        %p412 = pneg %p171
        %p413 = pneg %p195
        %p414 = pneg %p192
        %p415 = pneg %p216
        %p416 = pneg %p213
        %p417 = pneg %p237
        %p418 = pneg %p234
        %p419 = pneg %p258
        %p420 = pneg %p255
        %p421 = pneg %p279
        %p422 = pneg %p276
        %p423 = pneg %p300
        %p424 = pneg %p297
        %p425 = pneg %p326
        %p426 = pneg %p323
        %s427 = sand.u32 %s313, 1
        %s428 = scalar_lea.sflag [#allocation3], %s427
        %s429 = sand.u32 %s313, 1
        %s430 = smul.addr %s429, 8
        %s431 = scalar_lea.vmem [#allocation2], %s430
        %p432 = scmp.lt.s32.totalorder %s27, 1
        %s433 = scalar_select %p432, %s27, 1
        %s434 = smul.addr %s433, 8
        %s435 = scalar_lea.vmem %s0, %s434
        %v436 = vld [vmem:[%s435] sm:$0xff]
        %v437 = vld [vmem:[%s1] sm:$0xff]
        %v438 = vld [vmem:[%s1 + $0x8] sm:$0xff]
        %v439 = vld [vmem:[%s1 + $0x10] sm:$0xff]
        %v440 = vld [vmem:[%s1 + $0x18] sm:$0xff]
        %v441 = vld [vmem:[%s2] sm:$0x1]
        %v443 = vperm.slane %v441, 0
        %vm445 = vcmask 261120
        %v447 = vsel %vm445, %v436, 0
        %449 = vmatpush.msra.mxu0 0.0
        %450 = vmatpush.msra.mxu0 0.0
        %451 = vmatpush.msra.mxu0 0.0
        %452 = vmatpush.msra.mxu0 0.0
        %453 = vmatpush.msra.mxu0 0.0
        %454 = vmatpush.msra.mxu0 0.0
        %455 = vmatpush.msra.mxu0 0.0
        %456 = vmatpush.msra.mxu0 0.0
        %457 = vmatpush.msra.mxu0 0.0
        %458 = vmatpush.msra.mxu0 0.0
        %459 = vmatpush.msra.mxu0 0.0
        %460 = vmatpush.msra.mxu0 0.0
        %461 = vmatpush.msra.mxu0 %v440
        %462 = vmatpush.msra.mxu0 %v439
        %463 = vmatpush.msra.mxu0 %v438
        %464 = vmatpush.msra.mxu0 %v437
        %465 = vmatmul.f32.gmra.mxu0 %v447
        %v466 = vpop.f32.mrf.mxu0
        %v467 = vadd.f32 %v443, %v466
        %468 = vdwg.mxu0
        %v469 = vmul.f32 %v467, 0.35355338
        %471 = vrot.lane.b32.xlu0 %v467, 96
        %v472 = vpop.permute.xlu0 %471
        %v474 = vsel %vm445, %v469, 0
        %v476 = vsel %vm445, %v472, 0
        %478 = vmatpush.xpose.msra.mxu0 0.0
        %479 = vmatpush.xpose.msra.mxu0 0.0
        %480 = vmatpush.xpose.msra.mxu0 0.0
        %481 = vmatpush.xpose.msra.mxu0 0.0
        %482 = vmatpush.xpose.msra.mxu0 0.0
        %483 = vmatpush.xpose.msra.mxu0 0.0
        %484 = vmatpush.xpose.msra.mxu0 0.0
        %485 = vmatpush.xpose.msra.mxu0 0.0
        %486 = vmatpush.xpose.msra.mxu0 0.0
        %487 = vmatpush.xpose.msra.mxu0 0.0
        %488 = vmatpush.xpose.msra.mxu0 0.0
        %489 = vmatpush.xpose.msra.mxu0 0.0
        %490 = vmatpush.xpose.msra.mxu0 0.0
        %491 = vmatpush.xpose.msra.mxu0 0.0
        %492 = vmatpush.xpose.msra.mxu0 0.0
        %493 = vmatpush.xpose.msra.mxu0 %v476
        %494 = vmatmul.f32.gmra.mxu0 %v474
        %v495 = vpop.f32.mrf.mxu0
        %v496 = vadd.f32 0.0, %v495
        %497 = vdwg.mxu0
        %vm498 = vcmask 64512
        %v499 = vsel %vm498, %v496, -inf
        %500 = vmax.xlane.f32.xlu0 %v499
        %v501 = vpop.xlane.xlu0 %500
        %v502 = vsub.f32 %v496, %v501
        %v503 = vmul.f32 %v502, 1.442695
        %v504 = vpow.pop %v503
        %v505 = vsel %vm498, %v504, 0.0
        %506 = vadd.xlane.f32.xlu0 %v505
        %v507 = vpop.xlane.xlu0 %506
        %v508 = vrcp.pop %v507
        %v509 = vmul.f32 %v507, %v508
        %v510 = vsub.f32 1.0, %v509
        %v511 = vmul.f32 %v508, %v510
        %v512 = vadd.f32 %v508, %v511
        %vm513 = vweird.f32 %v507
        %vm514 = vweird.f32 %v508
        %vm515 = vmor %vm513, %vm514
        %v516 = vsel %vm515, %v508, %v512
        %v517 = vand.u32 2147483647, %v507
        %vm518 = vcmp.eq.f32.partialorder %v517, 8.507059e+37
        %v519 = vand.u32 %v507, 2147483648
        %v520 = vor.u32 1.1754944e-38, %v519
        %v521 = vsel %vm518, %v520, %v516
        %v522 = vmul.f32 %v504, %v521
        %523 = vrot.lane.b32.xlu0 %v467, 64
        %v524 = vpop.permute.xlu0 %523
        %v527 = vsel %vm498, %v522, 0
        %529 = vmatpush.msra.mxu0 0.0
        %530 = vmatpush.msra.mxu0 0.0
        %531 = vmatpush.msra.mxu0 0.0
        %532 = vmatpush.msra.mxu0 0.0
        %533 = vmatpush.msra.mxu0 0.0
        %534 = vmatpush.msra.mxu0 0.0
        %535 = vmatpush.msra.mxu0 0.0
        %536 = vmatpush.msra.mxu0 0.0
        %537 = vmatpush.msra.mxu0 0.0
        %538 = vmatpush.msra.mxu0 0.0
        %539 = vmatpush.msra.mxu0 0.0
        %540 = vmatpush.msra.mxu0 0.0
        %541 = vmatpush.msra.mxu0 0.0
        %542 = vmatpush.msra.mxu0 0.0
        %543 = vmatpush.msra.mxu0 0.0
        %544 = vmatpush.msra.mxu0 %v524
        %545 = vmatmul.f32.gmra.mxu0 %v527
        %v546 = vpop.f32.mrf.mxu0
        %v547 = vadd.f32 0.0, %v546
        %548 = vdwg.mxu0
        %v549 = vld [vmem:[%s3] sm:$0xff]
        %v550 = vld [vmem:[%s3 + $0x8] sm:$0xff]
        %v551 = vld [vmem:[%s3 + $0x10] sm:$0xff]
        %v552 = vld [vmem:[%s3 + $0x18] sm:$0xff]
        %v553 = vld [vmem:[%s4] sm:$0x1]
        %v555 = vperm.slane %v553, 0
        %v558 = vsel %vm445, %v547, 0
        %560 = vmatpush.msra.mxu0 0.0
        %561 = vmatpush.msra.mxu0 0.0
        %562 = vmatpush.msra.mxu0 0.0
        %563 = vmatpush.msra.mxu0 0.0
        %564 = vmatpush.msra.mxu0 0.0
        %565 = vmatpush.msra.mxu0 0.0
        %566 = vmatpush.msra.mxu0 0.0
        %567 = vmatpush.msra.mxu0 0.0
        %568 = vmatpush.msra.mxu0 0.0
        %569 = vmatpush.msra.mxu0 0.0
        %570 = vmatpush.msra.mxu0 0.0
        %571 = vmatpush.msra.mxu0 0.0
        %572 = vmatpush.msra.mxu0 %v552
        %573 = vmatpush.msra.mxu0 %v551
        %574 = vmatpush.msra.mxu0 %v550
        %575 = vmatpush.msra.mxu0 %v549
        %576 = vmatmul.f32.gmra.mxu0 %v558
        %v577 = vpop.f32.mrf.mxu0
        %v578 = vadd.f32 %v555, %v577
        %579 = vdwg.mxu0
        %v580 = vadd.f32 %v578, %v436
        %v581 = vld [vmem:[%s5] sm:$0x1]
        %v582 = vld [vmem:[%s6] sm:$0x1]
        %v583 = vsel %vm445, %v580, 0.0
        %584 = vadd.xlane.f32.xlu0 %v583
        %v585 = vpop.xlane.xlu0 %584
        %v586 = vrcp.pop 32.0
        %v587 = vmul.f32 32.0, %v586
        %v588 = vsub.f32 1.0, %v587
        %v589 = vmul.f32 %v586, %v588
        %v590 = vadd.f32 %v586, %v589
        %vm591 = vweird.f32 %v586
        %v592 = vsel %vm591, %v586, %v590
        %v593 = vmul.f32 %v585, %v592
        %v594 = vsub.f32 %v580, %v593
        %v595 = vmul.f32 %v594, %v594
        %v596 = vsel %vm445, %v595, 0.0
        %597 = vadd.xlane.f32.xlu0 %v596
        %v598 = vpop.xlane.xlu0 %597
        %v599 = vmul.f32 %v598, %v592
        %v600 = vadd.f32 %v599, 1e-05
        %v601 = vrsqrt.pop %v600
        %v602 = vmul.f32 %v601, %v600
        %v603 = vmul.f32 %v602, %v601
        %v604 = vmul.f32 0.5, %v603
        %v605 = vsub.f32 1.5, %v604
        %v606 = vmul.f32 %v601, %v605
        %vm607 = vweird.f32 %v600
        %vm608 = vweird.f32 %v601
        %vm609 = vmor %vm607, %vm608
        %v610 = vsel %vm609, %v601, %v606
        %v611 = vmul.f32 %v594, %v610
        %v613 = vperm.slane %v581, 0
        %v615 = vmul.f32 %v611, %v613
        %v617 = vperm.slane %v582, 0
        %v619 = vadd.f32 %v615, %v617
        %v620 = vld [vmem:[%s7] sm:$0xff]
        %v621 = vld [vmem:[%s7 + $0x8] sm:$0xff]
        %v622 = vld [vmem:[%s7 + $0x10] sm:$0xff]
        %v623 = vld [vmem:[%s7 + $0x18] sm:$0xff]
        %v624 = vld [vmem:[%s8] sm:$0x1]
        %v626 = vperm.slane %v624, 0
        %v629 = vsel %vm445, %v619, 0
        %631 = vmatpush.msra.mxu0 0.0
        %632 = vmatpush.msra.mxu0 0.0
        %633 = vmatpush.msra.mxu0 0.0
        %634 = vmatpush.msra.mxu0 0.0
        %635 = vmatpush.msra.mxu0 0.0
        %636 = vmatpush.msra.mxu0 0.0
        %637 = vmatpush.msra.mxu0 0.0
        %638 = vmatpush.msra.mxu0 0.0
        %639 = vmatpush.msra.mxu0 0.0
        %640 = vmatpush.msra.mxu0 0.0
        %641 = vmatpush.msra.mxu0 0.0
        %642 = vmatpush.msra.mxu0 0.0
        %643 = vmatpush.msra.mxu0 %v623
        %644 = vmatpush.msra.mxu0 %v622
        %645 = vmatpush.msra.mxu0 %v621
        %646 = vmatpush.msra.mxu0 %v620
        %647 = vmatmul.f32.gmra.mxu0 %v629
        %v648 = vpop.f32.mrf.mxu0
        %v649 = vadd.f32 %v626, %v648
        %650 = vdwg.mxu0
        %v651 = vmax.f32 %v649, 0.0
        %v652 = vld [vmem:[%s9] sm:$0xff]
        %v653 = vld [vmem:[%s9 + $0x8] sm:$0xff]
        %v654 = vld [vmem:[%s9 + $0x10] sm:$0xff]
        %v655 = vld [vmem:[%s9 + $0x18] sm:$0xff]
        %v656 = vld [vmem:[%s9 + $0x20] sm:$0xff]
        %v657 = vld [vmem:[%s9 + $0x28] sm:$0xff]
        %v658 = vld [vmem:[%s9 + $0x30] sm:$0xff]
        %v659 = vld [vmem:[%s9 + $0x38] sm:$0xff]
        %v660 = vld [vmem:[%s9 + $0x40] sm:$0xff]
        %v661 = vld [vmem:[%s9 + $0x48] sm:$0xff]
        %v662 = vld [vmem:[%s9 + $0x50] sm:$0xff]
        %v663 = vld [vmem:[%s9 + $0x58] sm:$0xff]
        %v664 = vld [vmem:[%s9 + $0x60] sm:$0xff]
        %v665 = vld [vmem:[%s9 + $0x68] sm:$0xff]
        %v666 = vld [vmem:[%s9 + $0x70] sm:$0xff]
        %v667 = vld [vmem:[%s9 + $0x78] sm:$0xff]
        %v668 = vld [vmem:[%s10] sm:$0x1]
        %v670 = vperm.slane %v668, 0
        %672 = vmatpush.msra.mxu0 %v667
        %673 = vmatpush.msra.mxu0 %v666
        %674 = vmatpush.msra.mxu0 %v665
        %675 = vmatpush.msra.mxu0 %v664
        %676 = vmatpush.msra.mxu0 %v663
        %677 = vmatpush.msra.mxu0 %v662
        %678 = vmatpush.msra.mxu0 %v661
        %679 = vmatpush.msra.mxu0 %v660
        %680 = vmatpush.msra.mxu0 %v659
        %681 = vmatpush.msra.mxu0 %v658
        %682 = vmatpush.msra.mxu0 %v657
        %683 = vmatpush.msra.mxu0 %v656
        %684 = vmatpush.msra.mxu0 %v655
        %685 = vmatpush.msra.mxu0 %v654
        %686 = vmatpush.msra.mxu0 %v653
        %687 = vmatpush.msra.mxu0 %v652
        %688 = vmatmul.f32.gmra.mxu0 %v651
        %v689 = vpop.f32.mrf.mxu0
        %v690 = vadd.f32 %v670, %v689
        %691 = vdwg.mxu0
        %v692 = vadd.f32 %v690, %v619
        %v693 = vld [vmem:[%s11] sm:$0x1]
        %v694 = vld [vmem:[%s12] sm:$0x1]
        %v695 = vsel %vm445, %v692, 0.0
        %696 = vadd.xlane.f32.xlu0 %v695
        %v697 = vpop.xlane.xlu0 %696
        %v698 = vmul.f32 %v697, %v592
        %v699 = vsub.f32 %v692, %v698
        %v700 = vmul.f32 %v699, %v699
        %v701 = vsel %vm445, %v700, 0.0
        %702 = vadd.xlane.f32.xlu0 %v701
        %v703 = vpop.xlane.xlu0 %702
        %v704 = vmul.f32 %v703, %v592
        %v705 = vadd.f32 %v704, 1e-05
        %v706 = vrsqrt.pop %v705
        %v707 = vmul.f32 %v706, %v705
        %v708 = vmul.f32 %v707, %v706
        %v709 = vmul.f32 0.5, %v708
        %v710 = vsub.f32 1.5, %v709
        %v711 = vmul.f32 %v706, %v710
        %vm712 = vweird.f32 %v705
        %vm713 = vweird.f32 %v706
        %vm714 = vmor %vm712, %vm713
        %v715 = vsel %vm714, %v706, %v711
        %v716 = vmul.f32 %v699, %v715
        %v718 = vperm.slane %v693, 0
        %v720 = vmul.f32 %v716, %v718
        %v722 = vperm.slane %v694, 0
        %v724 = vadd.f32 %v720, %v722
        %725 = vst.msk [vmem:[%s431] sm:$0xff] %vm445, %v724
        %s726 = sand.u32 %s313, 1
        %s727 = scalar_lea.sflag [#allocation3], %s726
        %s728 = sand.u32 %s313, 1
        %s729 = smul.addr %s728, 8
        %s730 = scalar_lea.vmem [#allocation2], %s729
        // Predicated region
        $region73: #{tpu_custom_call.1} parent=71 // pred_check
          %p731 = pneg %p323
        $region74: #{tpu_custom_call.1} parent=71 // pred_check_branch
          %733 = sbr.rel (%p731) target = $region76
        $region75: #{tpu_custom_call.1} parent=71 // pred_region
          %735 = vsyncadd %s727, 0
          %s736 = smul.addr %s27, 8
          %s737 = scalar_lea.hbm %s13, %s736
          %s739 = sshll.u32 %s730, 4
          %s740 = int_to_ptr.vmem [resolvable:$true] %s739
          %s741 = sshll.u32 %s737, 4
          %s742 = int_to_ptr.hbm [resolvable:$true] %s741
          %744 = dma.vmem_to_hbm [thread:$0]  %s740, 128, %s742, %s727
        $region76: #{tpu_custom_call.1} parent=71 // pred_fallthru
          _
      $region72: #{tpu_custom_call.1} parent=5 // pred_fallthru
        _
      %p745 = scmp.le.s32.totalorder 2, %s22
      // Predicated region
      $region77: #{tpu_custom_call.1} parent=5 // pred_check
        %p746 = pneg %p745
      $region78: #{tpu_custom_call.1} parent=5 // pred_check_branch
        %748 = sbr.rel (%p746) target = $region80
      $region79: #{tpu_custom_call.1} parent=5 // pred_region
        %s749 = ssub.s32 %s22, 2
        // Predicated region
        $region81: #{tpu_custom_call.1} parent=79 // pred_check
          %p750 = pneg %p329
        $region82: #{tpu_custom_call.1} parent=79 // pred_check_branch
          %752 = sbr.rel (%p750) target = $region84
        $region83: #{tpu_custom_call.1} parent=79 // pred_region
          %s753 = sand.u32 %s314, 1
          %s754 = scalar_lea.sflag [#allocation3], %s753
          %s755 = sand.u32 %s314, 1
          %s756 = smul.addr %s755, 8
          %s757 = scalar_lea.vmem [#allocation2], %s756
          %759 = dma.done %s754, 128
        $region84: #{tpu_custom_call.1} parent=79 // pred_fallthru
          _
      $region80: #{tpu_custom_call.1} parent=5 // pred_fallthru
        _
    $region6: #{tpu_custom_call.1} parent=1 // loop_footer
      %s26 = sadd.s32 1, %s22
    $region7: #{tpu_custom_call.1} parent=1 // loop_footer_branch
      %21 = sbr.rel target = $region3
    $region8: #{tpu_custom_call.1} parent=1 // loop_exit
      _
    %760 = vsyncpa [#allocation3], 1
    %s761 = scalar_lea.sflag [#allocation3], 1
    %762 = vsyncpa %s761, 1

</llo_original>
